<compile_context>
chip_gen: v7x
topology: tpu7x:2x2x1
jax: 0.10.0
libtpu: 0.0.40
codegen_flags: <defaults>
</compile_context>

<pallas_src>
import jax
import jax.numpy as jnp
from jax.experimental import pallas as pl
from jax.experimental.pallas import tpu as pltpu


def _make_kernel(B, N, S, D, E, compute_dtype):
    n_item_rows = B * N
    n_rows = n_item_rows + B  # gathered rows: B*N item rows + B user rows

    def kernel(
        item_ids_ref,      # SMEM [B, N] int32   (scalar prefetch)
        user_id_ref,       # SMEM [B]    int32   (scalar prefetch)
        items_text_ref,    # VMEM [B, S, D]      compute_dtype
        user_text_ref,     # VMEM [B, S, D]      compute_dtype
        items_tbl_hbm,     # HBM  [V_items, E]   (memory_space=ANY)
        user_tbl_hbm,      # HBM  [V_user, E]    (memory_space=ANY)
        w_proj_ref,        # VMEM [E, D]         compute_dtype
        b_proj_ref,        # VMEM [1, D]         f32
        w_if_ref,          # VMEM [2D, D]        compute_dtype
        b_if_ref,          # VMEM [1, D]         f32
        w_uf_ref,          # VMEM [2D, D]        compute_dtype
        b_uf_ref,          # VMEM [1, D]         f32
        out_ref,           # VMEM [2B, D]        f32   (rows [0:B]=items, [B:2B]=user)
        gather_ref,        # VMEM [n_rows, E]    table dtype (scratch)
        sem,               # DMA semaphores (n_rows,)
    ):
        # ---- in-kernel embedding gather: one small DMA per id row ----------
        copies = []
        for b in range(B):
            for n in range(N):
                r = b * N + n
                cp = pltpu.make_async_copy(
                    items_tbl_hbm.at[pl.ds(item_ids_ref[b, n], 1)],
                    gather_ref.at[pl.ds(r, 1)],
                    sem.at[r],
                )
                cp.start()
                copies.append(cp)
        for b in range(B):
            r = n_item_rows + b
            cp = pltpu.make_async_copy(
                user_tbl_hbm.at[pl.ds(user_id_ref[b], 1)],
                gather_ref.at[pl.ds(r, 1)],
                sem.at[r],
            )
            cp.start()
            copies.append(cp)

        # ---- text mean over the sequence axis (f32 accumulation) ----------
        # (overlaps with the gather DMAs above)
        items_text = jnp.mean(items_text_ref[...].astype(jnp.float32), axis=1)  # [B, D]
        user_text = jnp.mean(user_text_ref[...].astype(jnp.float32), axis=1)    # [B, D]

        for cp in copies:
            cp.wait()

        rows = gather_ref[...].astype(jnp.float32)               # [n_rows, E]
        items_id = jnp.concatenate(
            [rows[b * N:(b + 1) * N].mean(axis=0, keepdims=True) for b in range(B)],
            axis=0,
        )                                                        # [B, E]
        user_id_e = rows[n_item_rows:n_item_rows + B]            # [B, E]

        # ---- shared id_projection: ONE stacked matmul for items + user -----
        ids_all = jnp.concatenate([items_id, user_id_e], axis=0)  # [2B, E]
        id_proj = (
            jnp.dot(ids_all.astype(compute_dtype), w_proj_ref[...],
                    preferred_element_type=jnp.float32)
            + b_proj_ref[...]
        )                                                          # [2B, D] f32
        items_id_proj = id_proj[:B]
        user_id_proj = id_proj[B:]

        # ---- fusion: lane-concat [text*0.5, id_proj*1.5], one K=2D matmul each
        items_cat = jnp.concatenate([items_text * 0.5, items_id_proj * 1.5], axis=-1)
        user_cat = jnp.concatenate([user_text * 0.5, user_id_proj * 1.5], axis=-1)
        items_out = (
            jnp.dot(items_cat.astype(compute_dtype), w_if_ref[...],
                    preferred_element_type=jnp.float32)
            + b_if_ref[...]
        )
        user_out = (
            jnp.dot(user_cat.astype(compute_dtype), w_uf_ref[...],
                    preferred_element_type=jnp.float32)
            + b_uf_ref[...]
        )

        # single [2B, D] output store (one output DMA)
        out_ref[...] = jnp.concatenate([items_out, user_out], axis=0)

    return kernel


def multimodal_forward(items_text_hidden, user_text_hidden, item_ids, user_id,
                       params, *, compute_dtype=jnp.bfloat16):
    """Returns (items_embeddings [B, D], user_embeddings [B, D])."""
    B, S, D = items_text_hidden.shape
    N = item_ids.shape[1]
    E = params["items_id_emb"].shape[1]
    n_rows = B * N + B

    # MXU operands in bf16 (halves weight/activation HBM DMA on v6e/v7x); all
    # accumulation + elementwise stays f32 inside the kernel (v5e-safe).
    items_text = items_text_hidden.astype(compute_dtype)
    user_text = user_text_hidden.astype(compute_dtype)
    w_proj = params["w_proj"].astype(compute_dtype)
    w_if = params["w_items_fusion"].astype(compute_dtype)   # kept as [2D, D]
    w_uf = params["w_user_fusion"].astype(compute_dtype)    # kept as [2D, D]
    b_proj = params["b_proj"].astype(jnp.float32)
    b_if = params["b_items_fusion"].astype(jnp.float32)
    b_uf = params["b_user_fusion"].astype(jnp.float32)
    items_tbl = params["items_id_emb"]
    user_tbl = params["user_id_emb"]

    kernel = _make_kernel(B, N, S, D, E, compute_dtype)

    flops = 2 * (2 * B) * E * D + 2 * 2 * B * (2 * D) * D
    bytes_accessed = int(
        items_text.size * items_text.dtype.itemsize
        + user_text.size * user_text.dtype.itemsize
        + n_rows * E * items_tbl.dtype.itemsize
        + w_proj.size * w_proj.dtype.itemsize
        + w_if.size * w_if.dtype.itemsize
        + w_uf.size * w_uf.dtype.itemsize
        + (b_proj.size + b_if.size + b_uf.size) * 4
        + 2 * B * D * 4
    )
    cost = pl.CostEstimate(flops=flops, transcendentals=0,
                           bytes_accessed=bytes_accessed)

    grid_spec = pltpu.PrefetchScalarGridSpec(
        num_scalar_prefetch=2,
        grid=(1,),
        in_specs=[
            pl.BlockSpec((B, S, D), lambda i, *_: (0, 0, 0)),   # items text hidden
            pl.BlockSpec((B, S, D), lambda i, *_: (0, 0, 0)),   # user text hidden
            pl.BlockSpec(memory_space=pl.ANY),                  # items id table (HBM)
            pl.BlockSpec(memory_space=pl.ANY),                  # user id table (HBM)
            pl.BlockSpec((E, D), lambda i, *_: (0, 0)),         # w_proj
            pl.BlockSpec((1, D), lambda i, *_: (0, 0)),         # b_proj
            pl.BlockSpec((2 * D, D), lambda i, *_: (0, 0)),     # w_items_fusion [2D,D]
            pl.BlockSpec((1, D), lambda i, *_: (0, 0)),         # b_items_fusion
            pl.BlockSpec((2 * D, D), lambda i, *_: (0, 0)),     # w_user_fusion [2D,D]
            pl.BlockSpec((1, D), lambda i, *_: (0, 0)),         # b_user_fusion
        ],
        out_specs=pl.BlockSpec((2 * B, D), lambda i, *_: (0, 0)),
        scratch_shapes=[
            pltpu.VMEM((n_rows, E), items_tbl.dtype),           # gathered id rows
            pltpu.SemaphoreType.DMA((n_rows,)),
        ],
    )

    out = pl.pallas_call(
        kernel,
        grid_spec=grid_spec,
        out_shape=jax.ShapeDtypeStruct((2 * B, D), jnp.float32),
        compiler_params=pltpu.CompilerParams(
            dimension_semantics=("arbitrary",),
        ),
        cost_estimate=cost,
    )(
        item_ids.astype(jnp.int32), user_id.astype(jnp.int32),   # scalar prefetch
        items_text, user_text, items_tbl, user_tbl,
        w_proj, b_proj, w_if, b_if, w_uf, b_uf,
    )
    return out[:B], out[B:]


def _reference(items_text_hidden, user_text_hidden, item_ids, user_id, params):
    items_text = items_text_hidden.mean(axis=1)
    user_text = user_text_hidden.mean(axis=1)
    items_id = jnp.take(params["items_id_emb"], item_ids, axis=0).mean(axis=1)
    user_id_e = jnp.take(params["user_id_emb"], user_id, axis=0)
    items_id_p = items_id @ params["w_proj"] + params["b_proj"][0]
    user_id_p = user_id_e @ params["w_proj"] + params["b_proj"][0]
    items_cat = jnp.concatenate([items_text * 0.5, items_id_p * 1.5], axis=-1)
    user_cat = jnp.concatenate([user_text * 0.5, user_id_p * 1.5], axis=-1)
    items_out = items_cat @ params["w_items_fusion"] + params["b_items_fusion"][0]
    user_out = user_cat @ params["w_user_fusion"] + params["b_user_fusion"][0]
    return items_out, user_out


if __name__ == "__main__":
    # Small shapes consistent with the module's forward.
    B = 2           # batch
    S = 8           # text sequence length
    N = 4           # number of item ids per example
    D = 256         # text_embed_dim
    E = 128         # id_embed_dim
    USER_VOCAB = 50
    ITEMS_VOCAB = 60

    key = jax.random.PRNGKey(0)
    ks = jax.random.split(key, 12)

    params = {
        "user_id_emb": jax.random.normal(ks[0], (USER_VOCAB, E), jnp.float32) * 0.02,
        "items_id_emb": jax.random.normal(ks[1], (ITEMS_VOCAB, E), jnp.float32) * 0.02,
        "w_proj": jax.random.normal(ks[2], (E, D), jnp.float32) * 0.02,
        "b_proj": jax.random.normal(ks[3], (1, D), jnp.float32) * 0.02,
        "w_items_fusion": jax.random.normal(ks[4], (2 * D, D), jnp.float32) * 0.02,
        "b_items_fusion": jax.random.normal(ks[5], (1, D), jnp.float32) * 0.02,
        "w_user_fusion": jax.random.normal(ks[6], (2 * D, D), jnp.float32) * 0.02,
        "b_user_fusion": jax.random.normal(ks[7], (1, D), jnp.float32) * 0.02,
    }

    items_text_hidden = jax.random.normal(ks[8], (B, S, D), jnp.float32)
    user_text_hidden = jax.random.normal(ks[9], (B, S, D), jnp.float32)
    item_ids = jax.random.randint(ks[10], (B, N), 0, ITEMS_VOCAB, dtype=jnp.int32)
    user_id = jax.random.randint(ks[11], (B,), 0, USER_VOCAB, dtype=jnp.int32)

    items_emb, user_emb = multimodal_forward(
        items_text_hidden, user_text_hidden, item_ids, user_id, params
    )
    jax.block_until_ready((items_emb, user_emb))

    ref_items, ref_user = _reference(
        items_text_hidden, user_text_hidden, item_ids, user_id, params
    )
    # bf16 MXU operands with f32 accumulation -> compare against the f32 reference
    # with a tolerance that covers bf16 operand rounding.
    assert jnp.allclose(items_emb, ref_items, atol=2e-2, rtol=2e-2)
    assert jnp.allclose(user_emb, ref_user, atol=2e-2, rtol=2e-2)

    print("KERNEL_OK")
</pallas_src>

<mosaic_0001>
module attributes {stable_mosaic.version = 11 : i64} {
  func.func @kernel(%arg0: i32, %arg1: memref<2x4xi32, #tpu.memory_space<smem>>, %arg2: memref<2xi32, #tpu.memory_space<smem>>, %arg3: memref<2x8x256xbf16, #tpu.memory_space<vmem>>, %arg4: memref<2x8x256xbf16, #tpu.memory_space<vmem>>, %arg5: memref<60x128xf32, #tpu.memory_space<any>>, %arg6: memref<50x128xf32, #tpu.memory_space<any>>, %arg7: memref<128x256xbf16, #tpu.memory_space<vmem>>, %arg8: memref<1x256xf32, #tpu.memory_space<vmem>>, %arg9: memref<512x256xbf16, #tpu.memory_space<vmem>>, %arg10: memref<1x256xf32, #tpu.memory_space<vmem>>, %arg11: memref<512x256xbf16, #tpu.memory_space<vmem>>, %arg12: memref<1x256xf32, #tpu.memory_space<vmem>>, %arg13: memref<4x256xf32, #tpu.memory_space<vmem>>, %arg14: memref<10x128xf32, #tpu.memory_space<vmem>>, %arg15: memref<10x!tpu.dma_semaphore, #tpu.memory_space<semaphore_mem>>) attributes {dimension_semantics = [#tpu.dimension_semantics<arbitrary>], iteration_bounds = array<i64: 1>, scalar_prefetch = 2 : i64, scratch_operands = 2 : i64, tpu.core_type = #tpu.core_type<tc>, window_params = [{pipeline_mode = #tpu.pipeline_mode<synchronous>, transform_indices = @transform_0, window_bounds = array<i64: 2, 8, 256>}, {pipeline_mode = #tpu.pipeline_mode<synchronous>, transform_indices = @transform_1, window_bounds = array<i64: 2, 8, 256>}, {}, {}, {pipeline_mode = #tpu.pipeline_mode<synchronous>, transform_indices = @transform_4, window_bounds = array<i64: 128, 256>}, {pipeline_mode = #tpu.pipeline_mode<synchronous>, transform_indices = @transform_5, window_bounds = array<i64: 1, 256>}, {pipeline_mode = #tpu.pipeline_mode<synchronous>, transform_indices = @transform_6, window_bounds = array<i64: 512, 256>}, {pipeline_mode = #tpu.pipeline_mode<synchronous>, transform_indices = @transform_7, window_bounds = array<i64: 1, 256>}, {pipeline_mode = #tpu.pipeline_mode<synchronous>, transform_indices = @transform_8, window_bounds = array<i64: 512, 256>}, {pipeline_mode = #tpu.pipeline_mode<synchronous>, transform_indices = @transform_9, window_bounds = array<i64: 1, 256>}, {pipeline_mode = #tpu.pipeline_mode<synchronous>, transform_indices = @transform_10, window_bounds = array<i64: 4, 256>}]} {
    %c0 = arith.constant 0 : index
    %c0_0 = arith.constant 0 : index
    %0 = memref.load %arg1[%c0, %c0_0] : memref<2x4xi32, #tpu.memory_space<smem>>
    %c0_i32 = arith.constant 0 : i32
    %c0_i32_1 = arith.constant 0 : i32
    %1 = tpu.memref_slice %arg5[%0, %c0_i32_1] : memref<60x128xf32, #tpu.memory_space<any>> -> memref<1x128xf32, #tpu.memory_space<any>>
    %c0_i32_2 = arith.constant 0 : i32
    %c0_i32_3 = arith.constant 0 : i32
    %2 = tpu.memref_slice %arg14[%c0_i32_2, %c0_i32_3] : memref<10x128xf32, #tpu.memory_space<vmem>> -> memref<1x128xf32, #tpu.memory_space<vmem>>
    %3 = tpu.memref_slice %arg15[%c0_i32] : memref<10x!tpu.dma_semaphore, #tpu.memory_space<semaphore_mem>> -> memref<1x!tpu.dma_semaphore, #tpu.memory_space<semaphore_mem>>
    %4 = tpu.memref_squeeze %3 : memref<1x!tpu.dma_semaphore, #tpu.memory_space<semaphore_mem>> -> memref<!tpu.dma_semaphore, #tpu.memory_space<semaphore_mem>>
    tpu.enqueue_dma source(%1 : memref<1x128xf32, #tpu.memory_space<any>>) target(%2 : memref<1x128xf32, #tpu.memory_space<vmem>>) target_semaphore(%4 : memref<!tpu.dma_semaphore, #tpu.memory_space<semaphore_mem>>)
    %c0_4 = arith.constant 0 : index
    %c1 = arith.constant 1 : index
    %5 = memref.load %arg1[%c0_4, %c1] : memref<2x4xi32, #tpu.memory_space<smem>>
    %c1_i32 = arith.constant 1 : i32
    %c0_i32_5 = arith.constant 0 : i32
    %6 = tpu.memref_slice %arg5[%5, %c0_i32_5] : memref<60x128xf32, #tpu.memory_space<any>> -> memref<1x128xf32, #tpu.memory_space<any>>
    %c1_i32_6 = arith.constant 1 : i32
    %c0_i32_7 = arith.constant 0 : i32
    %7 = tpu.memref_slice %arg14[%c1_i32_6, %c0_i32_7] : memref<10x128xf32, #tpu.memory_space<vmem>> -> memref<1x128xf32, #tpu.memory_space<vmem>>
    %8 = tpu.memref_slice %arg15[%c1_i32] : memref<10x!tpu.dma_semaphore, #tpu.memory_space<semaphore_mem>> -> memref<1x!tpu.dma_semaphore, #tpu.memory_space<semaphore_mem>>
    %9 = tpu.memref_squeeze %8 : memref<1x!tpu.dma_semaphore, #tpu.memory_space<semaphore_mem>> -> memref<!tpu.dma_semaphore, #tpu.memory_space<semaphore_mem>>
    tpu.enqueue_dma source(%6 : memref<1x128xf32, #tpu.memory_space<any>>) target(%7 : memref<1x128xf32, #tpu.memory_space<vmem>>) target_semaphore(%9 : memref<!tpu.dma_semaphore, #tpu.memory_space<semaphore_mem>>)
    %c0_8 = arith.constant 0 : index
    %c2 = arith.constant 2 : index
    %10 = memref.load %arg1[%c0_8, %c2] : memref<2x4xi32, #tpu.memory_space<smem>>
    %c2_i32 = arith.constant 2 : i32
    %c0_i32_9 = arith.constant 0 : i32
    %11 = tpu.memref_slice %arg5[%10, %c0_i32_9] : memref<60x128xf32, #tpu.memory_space<any>> -> memref<1x128xf32, #tpu.memory_space<any>>
    %c2_i32_10 = arith.constant 2 : i32
    %c0_i32_11 = arith.constant 0 : i32
    %12 = tpu.memref_slice %arg14[%c2_i32_10, %c0_i32_11] : memref<10x128xf32, #tpu.memory_space<vmem>> -> memref<1x128xf32, #tpu.memory_space<vmem>>
    %13 = tpu.memref_slice %arg15[%c2_i32] : memref<10x!tpu.dma_semaphore, #tpu.memory_space<semaphore_mem>> -> memref<1x!tpu.dma_semaphore, #tpu.memory_space<semaphore_mem>>
    %14 = tpu.memref_squeeze %13 : memref<1x!tpu.dma_semaphore, #tpu.memory_space<semaphore_mem>> -> memref<!tpu.dma_semaphore, #tpu.memory_space<semaphore_mem>>
    tpu.enqueue_dma source(%11 : memref<1x128xf32, #tpu.memory_space<any>>) target(%12 : memref<1x128xf32, #tpu.memory_space<vmem>>) target_semaphore(%14 : memref<!tpu.dma_semaphore, #tpu.memory_space<semaphore_mem>>)
    %c0_12 = arith.constant 0 : index
    %c3 = arith.constant 3 : index
    %15 = memref.load %arg1[%c0_12, %c3] : memref<2x4xi32, #tpu.memory_space<smem>>
    %c3_i32 = arith.constant 3 : i32
    %c0_i32_13 = arith.constant 0 : i32
    %16 = tpu.memref_slice %arg5[%15, %c0_i32_13] : memref<60x128xf32, #tpu.memory_space<any>> -> memref<1x128xf32, #tpu.memory_space<any>>
    %c3_i32_14 = arith.constant 3 : i32
    %c0_i32_15 = arith.constant 0 : i32
    %17 = tpu.memref_slice %arg14[%c3_i32_14, %c0_i32_15] : memref<10x128xf32, #tpu.memory_space<vmem>> -> memref<1x128xf32, #tpu.memory_space<vmem>>
    %18 = tpu.memref_slice %arg15[%c3_i32] : memref<10x!tpu.dma_semaphore, #tpu.memory_space<semaphore_mem>> -> memref<1x!tpu.dma_semaphore, #tpu.memory_space<semaphore_mem>>
    %19 = tpu.memref_squeeze %18 : memref<1x!tpu.dma_semaphore, #tpu.memory_space<semaphore_mem>> -> memref<!tpu.dma_semaphore, #tpu.memory_space<semaphore_mem>>
    tpu.enqueue_dma source(%16 : memref<1x128xf32, #tpu.memory_space<any>>) target(%17 : memref<1x128xf32, #tpu.memory_space<vmem>>) target_semaphore(%19 : memref<!tpu.dma_semaphore, #tpu.memory_space<semaphore_mem>>)
    %c1_16 = arith.constant 1 : index
    %c0_17 = arith.constant 0 : index
    %20 = memref.load %arg1[%c1_16, %c0_17] : memref<2x4xi32, #tpu.memory_space<smem>>
    %c4_i32 = arith.constant 4 : i32
    %c0_i32_18 = arith.constant 0 : i32
    %21 = tpu.memref_slice %arg5[%20, %c0_i32_18] : memref<60x128xf32, #tpu.memory_space<any>> -> memref<1x128xf32, #tpu.memory_space<any>>
    %c4_i32_19 = arith.constant 4 : i32
    %c0_i32_20 = arith.constant 0 : i32
    %22 = tpu.memref_slice %arg14[%c4_i32_19, %c0_i32_20] : memref<10x128xf32, #tpu.memory_space<vmem>> -> memref<1x128xf32, #tpu.memory_space<vmem>>
    %23 = tpu.memref_slice %arg15[%c4_i32] : memref<10x!tpu.dma_semaphore, #tpu.memory_space<semaphore_mem>> -> memref<1x!tpu.dma_semaphore, #tpu.memory_space<semaphore_mem>>
    %24 = tpu.memref_squeeze %23 : memref<1x!tpu.dma_semaphore, #tpu.memory_space<semaphore_mem>> -> memref<!tpu.dma_semaphore, #tpu.memory_space<semaphore_mem>>
    tpu.enqueue_dma source(%21 : memref<1x128xf32, #tpu.memory_space<any>>) target(%22 : memref<1x128xf32, #tpu.memory_space<vmem>>) target_semaphore(%24 : memref<!tpu.dma_semaphore, #tpu.memory_space<semaphore_mem>>)
    %c1_21 = arith.constant 1 : index
    %c1_22 = arith.constant 1 : index
    %25 = memref.load %arg1[%c1_21, %c1_22] : memref<2x4xi32, #tpu.memory_space<smem>>
    %c5_i32 = arith.constant 5 : i32
    %c0_i32_23 = arith.constant 0 : i32
    %26 = tpu.memref_slice %arg5[%25, %c0_i32_23] : memref<60x128xf32, #tpu.memory_space<any>> -> memref<1x128xf32, #tpu.memory_space<any>>
    %c5_i32_24 = arith.constant 5 : i32
    %c0_i32_25 = arith.constant 0 : i32
    %27 = tpu.memref_slice %arg14[%c5_i32_24, %c0_i32_25] : memref<10x128xf32, #tpu.memory_space<vmem>> -> memref<1x128xf32, #tpu.memory_space<vmem>>
    %28 = tpu.memref_slice %arg15[%c5_i32] : memref<10x!tpu.dma_semaphore, #tpu.memory_space<semaphore_mem>> -> memref<1x!tpu.dma_semaphore, #tpu.memory_space<semaphore_mem>>
    %29 = tpu.memref_squeeze %28 : memref<1x!tpu.dma_semaphore, #tpu.memory_space<semaphore_mem>> -> memref<!tpu.dma_semaphore, #tpu.memory_space<semaphore_mem>>
    tpu.enqueue_dma source(%26 : memref<1x128xf32, #tpu.memory_space<any>>) target(%27 : memref<1x128xf32, #tpu.memory_space<vmem>>) target_semaphore(%29 : memref<!tpu.dma_semaphore, #tpu.memory_space<semaphore_mem>>)
    %c1_26 = arith.constant 1 : index
    %c2_27 = arith.constant 2 : index
    %30 = memref.load %arg1[%c1_26, %c2_27] : memref<2x4xi32, #tpu.memory_space<smem>>
    %c6_i32 = arith.constant 6 : i32
    %c0_i32_28 = arith.constant 0 : i32
    %31 = tpu.memref_slice %arg5[%30, %c0_i32_28] : memref<60x128xf32, #tpu.memory_space<any>> -> memref<1x128xf32, #tpu.memory_space<any>>
    %c6_i32_29 = arith.constant 6 : i32
    %c0_i32_30 = arith.constant 0 : i32
    %32 = tpu.memref_slice %arg14[%c6_i32_29, %c0_i32_30] : memref<10x128xf32, #tpu.memory_space<vmem>> -> memref<1x128xf32, #tpu.memory_space<vmem>>
    %33 = tpu.memref_slice %arg15[%c6_i32] : memref<10x!tpu.dma_semaphore, #tpu.memory_space<semaphore_mem>> -> memref<1x!tpu.dma_semaphore, #tpu.memory_space<semaphore_mem>>
    %34 = tpu.memref_squeeze %33 : memref<1x!tpu.dma_semaphore, #tpu.memory_space<semaphore_mem>> -> memref<!tpu.dma_semaphore, #tpu.memory_space<semaphore_mem>>
    tpu.enqueue_dma source(%31 : memref<1x128xf32, #tpu.memory_space<any>>) target(%32 : memref<1x128xf32, #tpu.memory_space<vmem>>) target_semaphore(%34 : memref<!tpu.dma_semaphore, #tpu.memory_space<semaphore_mem>>)
    %c1_31 = arith.constant 1 : index
    %c3_32 = arith.constant 3 : index
    %35 = memref.load %arg1[%c1_31, %c3_32] : memref<2x4xi32, #tpu.memory_space<smem>>
    %c7_i32 = arith.constant 7 : i32
    %c0_i32_33 = arith.constant 0 : i32
    %36 = tpu.memref_slice %arg5[%35, %c0_i32_33] : memref<60x128xf32, #tpu.memory_space<any>> -> memref<1x128xf32, #tpu.memory_space<any>>
    %c7_i32_34 = arith.constant 7 : i32
    %c0_i32_35 = arith.constant 0 : i32
    %37 = tpu.memref_slice %arg14[%c7_i32_34, %c0_i32_35] : memref<10x128xf32, #tpu.memory_space<vmem>> -> memref<1x128xf32, #tpu.memory_space<vmem>>
    %38 = tpu.memref_slice %arg15[%c7_i32] : memref<10x!tpu.dma_semaphore, #tpu.memory_space<semaphore_mem>> -> memref<1x!tpu.dma_semaphore, #tpu.memory_space<semaphore_mem>>
    %39 = tpu.memref_squeeze %38 : memref<1x!tpu.dma_semaphore, #tpu.memory_space<semaphore_mem>> -> memref<!tpu.dma_semaphore, #tpu.memory_space<semaphore_mem>>
    tpu.enqueue_dma source(%36 : memref<1x128xf32, #tpu.memory_space<any>>) target(%37 : memref<1x128xf32, #tpu.memory_space<vmem>>) target_semaphore(%39 : memref<!tpu.dma_semaphore, #tpu.memory_space<semaphore_mem>>)
    %c0_36 = arith.constant 0 : index
    %40 = memref.load %arg2[%c0_36] : memref<2xi32, #tpu.memory_space<smem>>
    %c8_i32 = arith.constant 8 : i32
    %c0_i32_37 = arith.constant 0 : i32
    %41 = tpu.memref_slice %arg6[%40, %c0_i32_37] : memref<50x128xf32, #tpu.memory_space<any>> -> memref<1x128xf32, #tpu.memory_space<any>>
    %c8_i32_38 = arith.constant 8 : i32
    %c0_i32_39 = arith.constant 0 : i32
    %42 = tpu.memref_slice %arg14[%c8_i32_38, %c0_i32_39] : memref<10x128xf32, #tpu.memory_space<vmem>> -> memref<1x128xf32, #tpu.memory_space<vmem>>
    %43 = tpu.memref_slice %arg15[%c8_i32] : memref<10x!tpu.dma_semaphore, #tpu.memory_space<semaphore_mem>> -> memref<1x!tpu.dma_semaphore, #tpu.memory_space<semaphore_mem>>
    %44 = tpu.memref_squeeze %43 : memref<1x!tpu.dma_semaphore, #tpu.memory_space<semaphore_mem>> -> memref<!tpu.dma_semaphore, #tpu.memory_space<semaphore_mem>>
    tpu.enqueue_dma source(%41 : memref<1x128xf32, #tpu.memory_space<any>>) target(%42 : memref<1x128xf32, #tpu.memory_space<vmem>>) target_semaphore(%44 : memref<!tpu.dma_semaphore, #tpu.memory_space<semaphore_mem>>)
    %c1_40 = arith.constant 1 : index
    %45 = memref.load %arg2[%c1_40] : memref<2xi32, #tpu.memory_space<smem>>
    %c9_i32 = arith.constant 9 : i32
    %c0_i32_41 = arith.constant 0 : i32
    %46 = tpu.memref_slice %arg6[%45, %c0_i32_41] : memref<50x128xf32, #tpu.memory_space<any>> -> memref<1x128xf32, #tpu.memory_space<any>>
    %c9_i32_42 = arith.constant 9 : i32
    %c0_i32_43 = arith.constant 0 : i32
    %47 = tpu.memref_slice %arg14[%c9_i32_42, %c0_i32_43] : memref<10x128xf32, #tpu.memory_space<vmem>> -> memref<1x128xf32, #tpu.memory_space<vmem>>
    %48 = tpu.memref_slice %arg15[%c9_i32] : memref<10x!tpu.dma_semaphore, #tpu.memory_space<semaphore_mem>> -> memref<1x!tpu.dma_semaphore, #tpu.memory_space<semaphore_mem>>
    %49 = tpu.memref_squeeze %48 : memref<1x!tpu.dma_semaphore, #tpu.memory_space<semaphore_mem>> -> memref<!tpu.dma_semaphore, #tpu.memory_space<semaphore_mem>>
    tpu.enqueue_dma source(%46 : memref<1x128xf32, #tpu.memory_space<any>>) target(%47 : memref<1x128xf32, #tpu.memory_space<vmem>>) target_semaphore(%49 : memref<!tpu.dma_semaphore, #tpu.memory_space<semaphore_mem>>)
    %c0_44 = arith.constant 0 : index
    %c0_45 = arith.constant 0 : index
    %c0_46 = arith.constant 0 : index
    %50 = vector.load %arg3[%c0_44, %c0_45, %c0_46] : memref<2x8x256xbf16, #tpu.memory_space<vmem>>, vector<2x8x256xbf16>
    %51 = arith.extf %50 : vector<2x8x256xbf16> to vector<2x8x256xf32>
    %cst = arith.constant dense<0.000000e+00> : vector<2x256xf32>
    %52 = vector.multi_reduction <add>, %51, %cst [1] : vector<2x8x256xf32> to vector<2x256xf32>
    %cst_47 = arith.constant 8.000000e+00 : f32
    %53 = vector.broadcast %cst_47 : f32 to vector<2x256xf32>
    %54 = arith.divf %52, %53 : vector<2x256xf32>
    %c0_48 = arith.constant 0 : index
    %c0_49 = arith.constant 0 : index
    %c0_50 = arith.constant 0 : index
    %55 = vector.load %arg4[%c0_48, %c0_49, %c0_50] : memref<2x8x256xbf16, #tpu.memory_space<vmem>>, vector<2x8x256xbf16>
    %56 = arith.extf %55 : vector<2x8x256xbf16> to vector<2x8x256xf32>
    %cst_51 = arith.constant dense<0.000000e+00> : vector<2x256xf32>
    %57 = vector.multi_reduction <add>, %56, %cst_51 [1] : vector<2x8x256xf32> to vector<2x256xf32>
    %cst_52 = arith.constant 8.000000e+00 : f32
    %58 = vector.broadcast %cst_52 : f32 to vector<2x256xf32>
    %59 = arith.divf %57, %58 : vector<2x256xf32>
    %c0_i32_53 = arith.constant 0 : i32
    %c0_i32_54 = arith.constant 0 : i32
    %60 = tpu.memref_slice %arg5[%0, %c0_i32_54] : memref<60x128xf32, #tpu.memory_space<any>> -> memref<1x128xf32, #tpu.memory_space<any>>
    %c0_i32_55 = arith.constant 0 : i32
    %c0_i32_56 = arith.constant 0 : i32
    %61 = tpu.memref_slice %arg14[%c0_i32_55, %c0_i32_56] : memref<10x128xf32, #tpu.memory_space<vmem>> -> memref<1x128xf32, #tpu.memory_space<vmem>>
    %62 = tpu.memref_slice %arg15[%c0_i32_53] : memref<10x!tpu.dma_semaphore, #tpu.memory_space<semaphore_mem>> -> memref<1x!tpu.dma_semaphore, #tpu.memory_space<semaphore_mem>>
    %63 = tpu.memref_squeeze %62 : memref<1x!tpu.dma_semaphore, #tpu.memory_space<semaphore_mem>> -> memref<!tpu.dma_semaphore, #tpu.memory_space<semaphore_mem>>
    tpu.wait_dma2 semaphore(%63 : memref<!tpu.dma_semaphore, #tpu.memory_space<semaphore_mem>>) src(%60 : memref<1x128xf32, #tpu.memory_space<any>>) dst(%61 : memref<1x128xf32, #tpu.memory_space<vmem>>)
    %c1_i32_57 = arith.constant 1 : i32
    %c0_i32_58 = arith.constant 0 : i32
    %64 = tpu.memref_slice %arg5[%5, %c0_i32_58] : memref<60x128xf32, #tpu.memory_space<any>> -> memref<1x128xf32, #tpu.memory_space<any>>
    %c1_i32_59 = arith.constant 1 : i32
    %c0_i32_60 = arith.constant 0 : i32
    %65 = tpu.memref_slice %arg14[%c1_i32_59, %c0_i32_60] : memref<10x128xf32, #tpu.memory_space<vmem>> -> memref<1x128xf32, #tpu.memory_space<vmem>>
    %66 = tpu.memref_slice %arg15[%c1_i32_57] : memref<10x!tpu.dma_semaphore, #tpu.memory_space<semaphore_mem>> -> memref<1x!tpu.dma_semaphore, #tpu.memory_space<semaphore_mem>>
    %67 = tpu.memref_squeeze %66 : memref<1x!tpu.dma_semaphore, #tpu.memory_space<semaphore_mem>> -> memref<!tpu.dma_semaphore, #tpu.memory_space<semaphore_mem>>
    tpu.wait_dma2 semaphore(%67 : memref<!tpu.dma_semaphore, #tpu.memory_space<semaphore_mem>>) src(%64 : memref<1x128xf32, #tpu.memory_space<any>>) dst(%65 : memref<1x128xf32, #tpu.memory_space<vmem>>)
    %c2_i32_61 = arith.constant 2 : i32
    %c0_i32_62 = arith.constant 0 : i32
    %68 = tpu.memref_slice %arg5[%10, %c0_i32_62] : memref<60x128xf32, #tpu.memory_space<any>> -> memref<1x128xf32, #tpu.memory_space<any>>
    %c2_i32_63 = arith.constant 2 : i32
    %c0_i32_64 = arith.constant 0 : i32
    %69 = tpu.memref_slice %arg14[%c2_i32_63, %c0_i32_64] : memref<10x128xf32, #tpu.memory_space<vmem>> -> memref<1x128xf32, #tpu.memory_space<vmem>>
    %70 = tpu.memref_slice %arg15[%c2_i32_61] : memref<10x!tpu.dma_semaphore, #tpu.memory_space<semaphore_mem>> -> memref<1x!tpu.dma_semaphore, #tpu.memory_space<semaphore_mem>>
    %71 = tpu.memref_squeeze %70 : memref<1x!tpu.dma_semaphore, #tpu.memory_space<semaphore_mem>> -> memref<!tpu.dma_semaphore, #tpu.memory_space<semaphore_mem>>
    tpu.wait_dma2 semaphore(%71 : memref<!tpu.dma_semaphore, #tpu.memory_space<semaphore_mem>>) src(%68 : memref<1x128xf32, #tpu.memory_space<any>>) dst(%69 : memref<1x128xf32, #tpu.memory_space<vmem>>)
    %c3_i32_65 = arith.constant 3 : i32
    %c0_i32_66 = arith.constant 0 : i32
    %72 = tpu.memref_slice %arg5[%15, %c0_i32_66] : memref<60x128xf32, #tpu.memory_space<any>> -> memref<1x128xf32, #tpu.memory_space<any>>
    %c3_i32_67 = arith.constant 3 : i32
    %c0_i32_68 = arith.constant 0 : i32
    %73 = tpu.memref_slice %arg14[%c3_i32_67, %c0_i32_68] : memref<10x128xf32, #tpu.memory_space<vmem>> -> memref<1x128xf32, #tpu.memory_space<vmem>>
    %74 = tpu.memref_slice %arg15[%c3_i32_65] : memref<10x!tpu.dma_semaphore, #tpu.memory_space<semaphore_mem>> -> memref<1x!tpu.dma_semaphore, #tpu.memory_space<semaphore_mem>>
    %75 = tpu.memref_squeeze %74 : memref<1x!tpu.dma_semaphore, #tpu.memory_space<semaphore_mem>> -> memref<!tpu.dma_semaphore, #tpu.memory_space<semaphore_mem>>
    tpu.wait_dma2 semaphore(%75 : memref<!tpu.dma_semaphore, #tpu.memory_space<semaphore_mem>>) src(%72 : memref<1x128xf32, #tpu.memory_space<any>>) dst(%73 : memref<1x128xf32, #tpu.memory_space<vmem>>)
    %c4_i32_69 = arith.constant 4 : i32
    %c0_i32_70 = arith.constant 0 : i32
    %76 = tpu.memref_slice %arg5[%20, %c0_i32_70] : memref<60x128xf32, #tpu.memory_space<any>> -> memref<1x128xf32, #tpu.memory_space<any>>
    %c4_i32_71 = arith.constant 4 : i32
    %c0_i32_72 = arith.constant 0 : i32
    %77 = tpu.memref_slice %arg14[%c4_i32_71, %c0_i32_72] : memref<10x128xf32, #tpu.memory_space<vmem>> -> memref<1x128xf32, #tpu.memory_space<vmem>>
    %78 = tpu.memref_slice %arg15[%c4_i32_69] : memref<10x!tpu.dma_semaphore, #tpu.memory_space<semaphore_mem>> -> memref<1x!tpu.dma_semaphore, #tpu.memory_space<semaphore_mem>>
    %79 = tpu.memref_squeeze %78 : memref<1x!tpu.dma_semaphore, #tpu.memory_space<semaphore_mem>> -> memref<!tpu.dma_semaphore, #tpu.memory_space<semaphore_mem>>
    tpu.wait_dma2 semaphore(%79 : memref<!tpu.dma_semaphore, #tpu.memory_space<semaphore_mem>>) src(%76 : memref<1x128xf32, #tpu.memory_space<any>>) dst(%77 : memref<1x128xf32, #tpu.memory_space<vmem>>)
    %c5_i32_73 = arith.constant 5 : i32
    %c0_i32_74 = arith.constant 0 : i32
    %80 = tpu.memref_slice %arg5[%25, %c0_i32_74] : memref<60x128xf32, #tpu.memory_space<any>> -> memref<1x128xf32, #tpu.memory_space<any>>
    %c5_i32_75 = arith.constant 5 : i32
    %c0_i32_76 = arith.constant 0 : i32
    %81 = tpu.memref_slice %arg14[%c5_i32_75, %c0_i32_76] : memref<10x128xf32, #tpu.memory_space<vmem>> -> memref<1x128xf32, #tpu.memory_space<vmem>>
    %82 = tpu.memref_slice %arg15[%c5_i32_73] : memref<10x!tpu.dma_semaphore, #tpu.memory_space<semaphore_mem>> -> memref<1x!tpu.dma_semaphore, #tpu.memory_space<semaphore_mem>>
    %83 = tpu.memref_squeeze %82 : memref<1x!tpu.dma_semaphore, #tpu.memory_space<semaphore_mem>> -> memref<!tpu.dma_semaphore, #tpu.memory_space<semaphore_mem>>
    tpu.wait_dma2 semaphore(%83 : memref<!tpu.dma_semaphore, #tpu.memory_space<semaphore_mem>>) src(%80 : memref<1x128xf32, #tpu.memory_space<any>>) dst(%81 : memref<1x128xf32, #tpu.memory_space<vmem>>)
    %c6_i32_77 = arith.constant 6 : i32
    %c0_i32_78 = arith.constant 0 : i32
    %84 = tpu.memref_slice %arg5[%30, %c0_i32_78] : memref<60x128xf32, #tpu.memory_space<any>> -> memref<1x128xf32, #tpu.memory_space<any>>
    %c6_i32_79 = arith.constant 6 : i32
    %c0_i32_80 = arith.constant 0 : i32
    %85 = tpu.memref_slice %arg14[%c6_i32_79, %c0_i32_80] : memref<10x128xf32, #tpu.memory_space<vmem>> -> memref<1x128xf32, #tpu.memory_space<vmem>>
    %86 = tpu.memref_slice %arg15[%c6_i32_77] : memref<10x!tpu.dma_semaphore, #tpu.memory_space<semaphore_mem>> -> memref<1x!tpu.dma_semaphore, #tpu.memory_space<semaphore_mem>>
    %87 = tpu.memref_squeeze %86 : memref<1x!tpu.dma_semaphore, #tpu.memory_space<semaphore_mem>> -> memref<!tpu.dma_semaphore, #tpu.memory_space<semaphore_mem>>
    tpu.wait_dma2 semaphore(%87 : memref<!tpu.dma_semaphore, #tpu.memory_space<semaphore_mem>>) src(%84 : memref<1x128xf32, #tpu.memory_space<any>>) dst(%85 : memref<1x128xf32, #tpu.memory_space<vmem>>)
    %c7_i32_81 = arith.constant 7 : i32
    %c0_i32_82 = arith.constant 0 : i32
    %88 = tpu.memref_slice %arg5[%35, %c0_i32_82] : memref<60x128xf32, #tpu.memory_space<any>> -> memref<1x128xf32, #tpu.memory_space<any>>
    %c7_i32_83 = arith.constant 7 : i32
    %c0_i32_84 = arith.constant 0 : i32
    %89 = tpu.memref_slice %arg14[%c7_i32_83, %c0_i32_84] : memref<10x128xf32, #tpu.memory_space<vmem>> -> memref<1x128xf32, #tpu.memory_space<vmem>>
    %90 = tpu.memref_slice %arg15[%c7_i32_81] : memref<10x!tpu.dma_semaphore, #tpu.memory_space<semaphore_mem>> -> memref<1x!tpu.dma_semaphore, #tpu.memory_space<semaphore_mem>>
    %91 = tpu.memref_squeeze %90 : memref<1x!tpu.dma_semaphore, #tpu.memory_space<semaphore_mem>> -> memref<!tpu.dma_semaphore, #tpu.memory_space<semaphore_mem>>
    tpu.wait_dma2 semaphore(%91 : memref<!tpu.dma_semaphore, #tpu.memory_space<semaphore_mem>>) src(%88 : memref<1x128xf32, #tpu.memory_space<any>>) dst(%89 : memref<1x128xf32, #tpu.memory_space<vmem>>)
    %c8_i32_85 = arith.constant 8 : i32
    %c0_i32_86 = arith.constant 0 : i32
    %92 = tpu.memref_slice %arg6[%40, %c0_i32_86] : memref<50x128xf32, #tpu.memory_space<any>> -> memref<1x128xf32, #tpu.memory_space<any>>
    %c8_i32_87 = arith.constant 8 : i32
    %c0_i32_88 = arith.constant 0 : i32
    %93 = tpu.memref_slice %arg14[%c8_i32_87, %c0_i32_88] : memref<10x128xf32, #tpu.memory_space<vmem>> -> memref<1x128xf32, #tpu.memory_space<vmem>>
    %94 = tpu.memref_slice %arg15[%c8_i32_85] : memref<10x!tpu.dma_semaphore, #tpu.memory_space<semaphore_mem>> -> memref<1x!tpu.dma_semaphore, #tpu.memory_space<semaphore_mem>>
    %95 = tpu.memref_squeeze %94 : memref<1x!tpu.dma_semaphore, #tpu.memory_space<semaphore_mem>> -> memref<!tpu.dma_semaphore, #tpu.memory_space<semaphore_mem>>
    tpu.wait_dma2 semaphore(%95 : memref<!tpu.dma_semaphore, #tpu.memory_space<semaphore_mem>>) src(%92 : memref<1x128xf32, #tpu.memory_space<any>>) dst(%93 : memref<1x128xf32, #tpu.memory_space<vmem>>)
    %c9_i32_89 = arith.constant 9 : i32
    %c0_i32_90 = arith.constant 0 : i32
    %96 = tpu.memref_slice %arg6[%45, %c0_i32_90] : memref<50x128xf32, #tpu.memory_space<any>> -> memref<1x128xf32, #tpu.memory_space<any>>
    %c9_i32_91 = arith.constant 9 : i32
    %c0_i32_92 = arith.constant 0 : i32
    %97 = tpu.memref_slice %arg14[%c9_i32_91, %c0_i32_92] : memref<10x128xf32, #tpu.memory_space<vmem>> -> memref<1x128xf32, #tpu.memory_space<vmem>>
    %98 = tpu.memref_slice %arg15[%c9_i32_89] : memref<10x!tpu.dma_semaphore, #tpu.memory_space<semaphore_mem>> -> memref<1x!tpu.dma_semaphore, #tpu.memory_space<semaphore_mem>>
    %99 = tpu.memref_squeeze %98 : memref<1x!tpu.dma_semaphore, #tpu.memory_space<semaphore_mem>> -> memref<!tpu.dma_semaphore, #tpu.memory_space<semaphore_mem>>
    tpu.wait_dma2 semaphore(%99 : memref<!tpu.dma_semaphore, #tpu.memory_space<semaphore_mem>>) src(%96 : memref<1x128xf32, #tpu.memory_space<any>>) dst(%97 : memref<1x128xf32, #tpu.memory_space<vmem>>)
    %c0_93 = arith.constant 0 : index
    %c0_94 = arith.constant 0 : index
    %100 = vector.load %arg14[%c0_93, %c0_94] : memref<10x128xf32, #tpu.memory_space<vmem>>, vector<10x128xf32>
    %101 = vector.extract_strided_slice %100 {offsets = [0, 0], sizes = [4, 128], strides = [1, 1]} : vector<10x128xf32> to vector<4x128xf32>
    %cst_95 = arith.constant dense<0.000000e+00> : vector<128xf32>
    %102 = vector.multi_reduction <add>, %101, %cst_95 [0] : vector<4x128xf32> to vector<128xf32>
    %103 = vector.shape_cast %102 : vector<128xf32> to vector<1x128xf32>
    %cst_96 = arith.constant 4.000000e+00 : f32
    %104 = vector.broadcast %cst_96 : f32 to vector<1x128xf32>
    %105 = arith.divf %103, %104 : vector<1x128xf32>
    %106 = vector.extract_strided_slice %100 {offsets = [4, 0], sizes = [4, 128], strides = [1, 1]} : vector<10x128xf32> to vector<4x128xf32>
    %cst_97 = arith.constant dense<0.000000e+00> : vector<128xf32>
    %107 = vector.multi_reduction <add>, %106, %cst_97 [0] : vector<4x128xf32> to vector<128xf32>
    %108 = vector.shape_cast %107 : vector<128xf32> to vector<1x128xf32>
    %cst_98 = arith.constant 4.000000e+00 : f32
    %109 = vector.broadcast %cst_98 : f32 to vector<1x128xf32>
    %110 = arith.divf %108, %109 : vector<1x128xf32>
    %111 = tpu.concatenate %105, %110 in 0 : vector<1x128xf32>, vector<1x128xf32> -> vector<2x128xf32>
    %112 = vector.extract_strided_slice %100 {offsets = [8, 0], sizes = [2, 128], strides = [1, 1]} : vector<10x128xf32> to vector<2x128xf32>
    %113 = tpu.concatenate %111, %112 in 0 : vector<2x128xf32>, vector<2x128xf32> -> vector<4x128xf32>
    %114 = arith.truncf %113 : vector<4x128xf32> to vector<4x128xbf16>
    %c0_99 = arith.constant 0 : index
    %c0_100 = arith.constant 0 : index
    %115 = vector.load %arg7[%c0_99, %c0_100] : memref<128x256xbf16, #tpu.memory_space<vmem>>, vector<128x256xbf16>
    %cst_101 = arith.constant dense<0.000000e+00> : vector<4x256xf32>
    %116 = tpu.matmul %114, %115, %cst_101 {dimension_numbers = #tpu.dot_dimension_numbers<[1], [0], [0], [1], [0, 0, 1, 1], [], []>} : vector<4x128xbf16>, vector<128x256xbf16>, vector<4x256xf32> -> vector<4x256xf32>
    %c0_102 = arith.constant 0 : index
    %c0_103 = arith.constant 0 : index
    %117 = vector.load %arg8[%c0_102, %c0_103] : memref<1x256xf32, #tpu.memory_space<vmem>>, vector<1x256xf32>
    %118 = vector.broadcast %117 : vector<1x256xf32> to vector<4x256xf32>
    %119 = arith.addf %116, %118 : vector<4x256xf32>
    %120 = vector.extract_strided_slice %119 {offsets = [0, 0], sizes = [2, 256], strides = [1, 1]} : vector<4x256xf32> to vector<2x256xf32>
    %121 = vector.extract_strided_slice %119 {offsets = [2, 0], sizes = [2, 256], strides = [1, 1]} : vector<4x256xf32> to vector<2x256xf32>
    %cst_104 = arith.constant 5.000000e-01 : f32
    %122 = vector.broadcast %cst_104 : f32 to vector<2x256xf32>
    %123 = arith.mulf %54, %122 : vector<2x256xf32>
    %cst_105 = arith.constant 1.500000e+00 : f32
    %124 = vector.broadcast %cst_105 : f32 to vector<2x256xf32>
    %125 = arith.mulf %120, %124 : vector<2x256xf32>
    %126 = tpu.concatenate %123, %125 in 1 : vector<2x256xf32>, vector<2x256xf32> -> vector<2x512xf32>
    %cst_106 = arith.constant 5.000000e-01 : f32
    %127 = vector.broadcast %cst_106 : f32 to vector<2x256xf32>
    %128 = arith.mulf %59, %127 : vector<2x256xf32>
    %cst_107 = arith.constant 1.500000e+00 : f32
    %129 = vector.broadcast %cst_107 : f32 to vector<2x256xf32>
    %130 = arith.mulf %121, %129 : vector<2x256xf32>
    %131 = tpu.concatenate %128, %130 in 1 : vector<2x256xf32>, vector<2x256xf32> -> vector<2x512xf32>
    %132 = arith.truncf %126 : vector<2x512xf32> to vector<2x512xbf16>
    %c0_108 = arith.constant 0 : index
    %c0_109 = arith.constant 0 : index
    %133 = vector.load %arg9[%c0_108, %c0_109] : memref<512x256xbf16, #tpu.memory_space<vmem>>, vector<512x256xbf16>
    %cst_110 = arith.constant dense<0.000000e+00> : vector<2x256xf32>
    %134 = tpu.matmul %132, %133, %cst_110 {dimension_numbers = #tpu.dot_dimension_numbers<[1], [0], [0], [1], [0, 0, 1, 1], [], []>} : vector<2x512xbf16>, vector<512x256xbf16>, vector<2x256xf32> -> vector<2x256xf32>
    %c0_111 = arith.constant 0 : index
    %c0_112 = arith.constant 0 : index
    %135 = vector.load %arg10[%c0_111, %c0_112] : memref<1x256xf32, #tpu.memory_space<vmem>>, vector<1x256xf32>
    %136 = vector.broadcast %135 : vector<1x256xf32> to vector<2x256xf32>
    %137 = arith.addf %134, %136 : vector<2x256xf32>
    %138 = arith.truncf %131 : vector<2x512xf32> to vector<2x512xbf16>
    %c0_113 = arith.constant 0 : index
    %c0_114 = arith.constant 0 : index
    %139 = vector.load %arg11[%c0_113, %c0_114] : memref<512x256xbf16, #tpu.memory_space<vmem>>, vector<512x256xbf16>
    %cst_115 = arith.constant dense<0.000000e+00> : vector<2x256xf32>
    %140 = tpu.matmul %138, %139, %cst_115 {dimension_numbers = #tpu.dot_dimension_numbers<[1], [0], [0], [1], [0, 0, 1, 1], [], []>} : vector<2x512xbf16>, vector<512x256xbf16>, vector<2x256xf32> -> vector<2x256xf32>
    %c0_116 = arith.constant 0 : index
    %c0_117 = arith.constant 0 : index
    %141 = vector.load %arg12[%c0_116, %c0_117] : memref<1x256xf32, #tpu.memory_space<vmem>>, vector<1x256xf32>
    %142 = vector.broadcast %141 : vector<1x256xf32> to vector<2x256xf32>
    %143 = arith.addf %140, %142 : vector<2x256xf32>
    %144 = tpu.concatenate %137, %143 in 0 : vector<2x256xf32>, vector<2x256xf32> -> vector<4x256xf32>
    %c0_118 = arith.constant 0 : index
    %c0_119 = arith.constant 0 : index
    %145 = vector.load %arg13[%c0_118, %c0_119] : memref<4x256xf32, #tpu.memory_space<vmem>>, vector<4x256xf32>
    tpu.vector_store %arg13[%c0_118, %c0_119], %144 {strides = array<i32>} : memref<4x256xf32, #tpu.memory_space<vmem>>, vector<4x256xf32>,
    return
  }
  func.func @transform_0(%arg0: i32, %arg1: memref<2x4xi32, #tpu.memory_space<smem>>, %arg2: memref<2xi32, #tpu.memory_space<smem>>) -> (i32, i32, i32) {
    %c0_i32 = arith.constant 0 : i32
    %c0_i32_0 = arith.constant 0 : i32
    %c0_i32_1 = arith.constant 0 : i32
    %c0_i32_2 = arith.constant 0 : i32
    return %c0_i32, %c0_i32_0, %c0_i32_1 : i32, i32, i32
  }
  func.func @transform_1(%arg0: i32, %arg1: memref<2x4xi32, #tpu.memory_space<smem>>, %arg2: memref<2xi32, #tpu.memory_space<smem>>) -> (i32, i32, i32) {
    %c0_i32 = arith.constant 0 : i32
    %c0_i32_0 = arith.constant 0 : i32
    %c0_i32_1 = arith.constant 0 : i32
    %c0_i32_2 = arith.constant 0 : i32
    return %c0_i32, %c0_i32_0, %c0_i32_1 : i32, i32, i32
  }
  func.func @transform_4(%arg0: i32, %arg1: memref<2x4xi32, #tpu.memory_space<smem>>, %arg2: memref<2xi32, #tpu.memory_space<smem>>) -> (i32, i32) {
    %c0_i32 = arith.constant 0 : i32
    %c0_i32_0 = arith.constant 0 : i32
    %c0_i32_1 = arith.constant 0 : i32
    return %c0_i32, %c0_i32_0 : i32, i32
  }
  func.func @transform_5(%arg0: i32, %arg1: memref<2x4xi32, #tpu.memory_space<smem>>, %arg2: memref<2xi32, #tpu.memory_space<smem>>) -> (i32, i32) {
    %c0_i32 = arith.constant 0 : i32
    %c0_i32_0 = arith.constant 0 : i32
    %c0_i32_1 = arith.constant 0 : i32
    return %c0_i32, %c0_i32_0 : i32, i32
  }
  func.func @transform_6(%arg0: i32, %arg1: memref<2x4xi32, #tpu.memory_space<smem>>, %arg2: memref<2xi32, #tpu.memory_space<smem>>) -> (i32, i32) {
    %c0_i32 = arith.constant 0 : i32
    %c0_i32_0 = arith.constant 0 : i32
    %c0_i32_1 = arith.constant 0 : i32
    return %c0_i32, %c0_i32_0 : i32, i32
  }
  func.func @transform_7(%arg0: i32, %arg1: memref<2x4xi32, #tpu.memory_space<smem>>, %arg2: memref<2xi32, #tpu.memory_space<smem>>) -> (i32, i32) {
    %c0_i32 = arith.constant 0 : i32
    %c0_i32_0 = arith.constant 0 : i32
    %c0_i32_1 = arith.constant 0 : i32
    return %c0_i32, %c0_i32_0 : i32, i32
  }
  func.func @transform_8(%arg0: i32, %arg1: memref<2x4xi32, #tpu.memory_space<smem>>, %arg2: memref<2xi32, #tpu.memory_space<smem>>) -> (i32, i32) {
    %c0_i32 = arith.constant 0 : i32
    %c0_i32_0 = arith.constant 0 : i32
    %c0_i32_1 = arith.constant 0 : i32
    return %c0_i32, %c0_i32_0 : i32, i32
  }
  func.func @transform_9(%arg0: i32, %arg1: memref<2x4xi32, #tpu.memory_space<smem>>, %arg2: memref<2xi32, #tpu.memory_space<smem>>) -> (i32, i32) {
    %c0_i32 = arith.constant 0 : i32
    %c0_i32_0 = arith.constant 0 : i32
    %c0_i32_1 = arith.constant 0 : i32
    return %c0_i32, %c0_i32_0 : i32, i32
  }
  func.func @transform_10(%arg0: i32, %arg1: memref<2x4xi32, #tpu.memory_space<smem>>, %arg2: memref<2xi32, #tpu.memory_space<smem>>) -> (i32, i32) {
    %c0_i32 = arith.constant 0 : i32
    %c0_i32_0 = arith.constant 0 : i32
    %c0_i32_1 = arith.constant 0 : i32
    return %c0_i32, %c0_i32_0 : i32, i32
  }
}

</mosaic_0001>

<llo_original>
// kernel: tpu_custom_call.1
$region0: #{tpu_custom_call.1}
  #allocation0 [shape = 'u32[]', space=smem, size = 0x4, offset = 0x4, fixed_abs, tag = 'smem constant byte address 0x4 - core index']
  #allocation1 [shape = 'u32[144,128]{1,0:T(1,128)}', space=vmem, size = 0x12000, scoped, tag = 'internal scratch']
  #allocation2 [shape = 'f32[10,128]{1,0:T(8,128)}', space=vmem, size = 0x2000, scoped, tag = 'scratch operand']
  #allocation3 [shape = 's32[10]{0}', space=sflag, size = 0x28, scoped, tag = 'scratch operand']
  #allocation4 [shape = 's32[1]{0}', space=sflag, size = 0x4, scoped, tag = 'scoped memory for tpu_custom_call.1']
  #allocation5 [shape = 'u8[1024]{0}', space=smem, size = 0x400, scoped, tag = 'prefetched SMEM operand 0']
  #allocation6 [shape = 'u8[512]{0}', space=smem, size = 0x200, scoped, tag = 'prefetched SMEM operand 1']
  #allocation17 [shape = 's32[]', space=sflag, size = 0x4, offset = 0, fixed_abs, tag = 'sflag constant byte address 0x0 - dummy sync flag']
  #allocation18 [shape = 's32[]', space=sflag, size = 0x4, offset = 0, fixed_abs, tag = 'sflag constant byte address 0x0 - dummy sync flag']
  #allocation19 [shape = 'u32[]', space=smem, size = 0x4, offset = 0x44, fixed_abs, tag = 'smem constant byte address 0x44 - assertion arg 0']
  #allocation20 [shape = 'u32[]', space=smem, size = 0x4, offset = 0x48, fixed_abs, tag = 'smem constant byte address 0x48 - assertion arg 1']
  #allocation21 [shape = 's32[]', space=sflag, size = 0x4, offset = 0, fixed_abs, tag = 'sflag constant byte address 0x0 - dummy sync flag']
  #allocation22 [shape = 's32[]', space=sflag, size = 0x4, offset = 0, fixed_abs, tag = 'sflag constant byte address 0x0 - dummy sync flag']
  #allocation23 [shape = 's32[]', space=sflag, size = 0x4, offset = 0, fixed_abs, tag = 'sflag constant byte address 0x0 - dummy sync flag']
  #allocation24 [shape = 's32[]', space=sflag, size = 0x4, offset = 0, fixed_abs, tag = 'sflag constant byte address 0x0 - dummy sync flag']
  #allocation25 [shape = 's32[]', space=sflag, size = 0x4, offset = 0, fixed_abs, tag = 'sflag constant byte address 0x0 - dummy sync flag']
  #allocation26 [shape = 's32[]', space=sflag, size = 0x4, offset = 0, fixed_abs, tag = 'sflag constant byte address 0x0 - dummy sync flag']
  #allocation27 [shape = 's32[]', space=sflag, size = 0x4, offset = 0, fixed_abs, tag = 'sflag constant byte address 0x0 - dummy sync flag']
  #allocation28 [shape = 's32[]', space=sflag, size = 0x4, offset = 0, fixed_abs, tag = 'sflag constant byte address 0x0 - dummy sync flag']
  #allocation29 [shape = 's32[]', space=sflag, size = 0x4, offset = 0, fixed_abs, tag = 'sflag constant byte address 0x0 - dummy sync flag']
  #allocation30 [shape = 's32[]', space=sflag, size = 0x4, offset = 0, fixed_abs, tag = 'sflag constant byte address 0x0 - dummy sync flag']
  #allocation31 [shape = 's32[]', space=sflag, size = 0x4, offset = 0, fixed_abs, tag = 'sflag constant byte address 0x0 - dummy sync flag']
  #allocation32 [shape = 's32[]', space=sflag, size = 0x4, offset = 0, fixed_abs, tag = 'sflag constant byte address 0x0 - dummy sync flag']
  #allocation33 [shape = 's32[]', space=sflag, size = 0x4, offset = 0, fixed_abs, tag = 'sflag constant byte address 0x0 - dummy sync flag']
  #allocation34 [shape = 's32[]', space=sflag, size = 0x4, offset = 0, fixed_abs, tag = 'sflag constant byte address 0x0 - dummy sync flag']
  #allocation35 [shape = 's32[]', space=sflag, size = 0x4, offset = 0, fixed_abs, tag = 'sflag constant byte address 0x0 - dummy sync flag']
  #allocation36 [shape = 's32[]', space=sflag, size = 0x4, offset = 0, fixed_abs, tag = 'sflag constant byte address 0x0 - dummy sync flag']
  #allocation37 [shape = 's32[]', space=sflag, size = 0x4, offset = 0, fixed_abs, tag = 'sflag constant byte address 0x0 - dummy sync flag']
  #allocation38 [shape = 's32[]', space=sflag, size = 0x4, offset = 0, fixed_abs, tag = 'sflag constant byte address 0x0 - dummy sync flag']
  %s0 = inlined_call_operand.hbm [shape: s32[2,4], index: 0, kind: input, shape index: {}]
  %s1 = inlined_call_operand.vmem [shape: s32[2], index: 1, kind: input, shape index: {}]
  %s2 = inlined_call_operand.hbm [shape: bf16[2,8,256], index: 2, kind: input, shape index: {}]
  %s3 = inlined_call_operand.hbm [shape: bf16[2,8,256], index: 3, kind: input, shape index: {}]
  %s4 = inlined_call_operand.hbm [shape: f32[60,128], index: 4, kind: input, shape index: {}]
  %s5 = inlined_call_operand.hbm [shape: f32[50,128], index: 5, kind: input, shape index: {}]
  %s6 = inlined_call_operand.hbm [shape: bf16[128,256], index: 6, kind: input, shape index: {}]
  %s7 = inlined_call_operand.vmem [shape: f32[1,256], index: 7, kind: input, shape index: {}]
  %s8 = inlined_call_operand.hbm [shape: bf16[512,256], index: 8, kind: input, shape index: {}]
  %s9 = inlined_call_operand.vmem [shape: f32[1,256], index: 9, kind: input, shape index: {}]
  %s10 = inlined_call_operand.hbm [shape: bf16[512,256], index: 10, kind: input, shape index: {}]
  %s11 = inlined_call_operand.vmem [shape: f32[1,256], index: 11, kind: input, shape index: {}]
  %s12 = inlined_call_operand.hbm [shape: f32[4,256], index: 12, kind: output, shape index: {}]
  %s13 = sld [smem:[#allocation0]]
  $region102: #{tpu_custom_call.1} parent=0
    _
  %s15 = ssub.s32 1, %s13
  %s16 = scalar_select 0, %s15, %s13
  %18 = dma.hbm_to_smem %s0, 32, [#allocation5], [#allocation4]
  %s19 = sshll.u32 %s1, 4
  %s20 = int_to_ptr.vmem [resolvable:$true] %s19
  %22 = dma.vmem_to_smem %s20, 16, [#allocation6], [#allocation4]
  %23 = dma.done [#allocation4], 48
  %24 = sfence
  $region1: #{tpu_custom_call.1} parent=0
    #allocation7 [shape = 'u8[8192]{0}', space=vmem, size = 0x2000, scoped, tag = 'input window, operand 2, single buffered']
    #allocation8 [shape = 's32[1]{0}', space=sflag, size = 0x4, scoped, tag = 'scoped memory for tpu_custom_call.1']
    #allocation9 [shape = 's32[1]{0}', space=sflag, size = 0x4, scoped, tag = 'scoped memory for tpu_custom_call.1']
    #allocation10 [shape = 'u8[8192]{0}', space=vmem, size = 0x2000, scoped, tag = 'input window, operand 3, single buffered']
    #allocation11 [shape = 's32[1]{0}', space=sflag, size = 0x4, scoped, tag = 'scoped memory for tpu_custom_call.1']
    #allocation12 [shape = 'u8[65536]{0}', space=vmem, size = 0x10000, scoped, tag = 'input window, operand 6, single buffered']
    #allocation13 [shape = 'u8[262144]{0}', space=vmem, size = 0x40000, scoped, tag = 'input window, operand 8, single buffered']
    #allocation14 [shape = 's32[1]{0}', space=sflag, size = 0x4, scoped, tag = 'scoped memory for tpu_custom_call.1']
    #allocation15 [shape = 'u8[262144]{0}', space=vmem, size = 0x40000, scoped, tag = 'input window, operand 10, single buffered']
    #allocation16 [shape = 'u8[4096]{0}', space=vmem, size = 0x1000, scoped, tag = 'output window, operand 0, single buffered']
    %25 = vsyncpa [#allocation8], 0
    %26 = vsyncpa [#allocation11], 0
    %27 = vsyncpa [#allocation14], 0
    %28 = vsyncpa [#allocation9], 0
    // Predicated region
    $region2: #{tpu_custom_call.1} parent=1 // pred_check
      _
    $region3: #{tpu_custom_call.1} parent=1 // pred_check_branch
      %30 = sbr.rel (0) target = $region5
    $region4: #{tpu_custom_call.1} parent=1 // pred_region
      %s32 = ssub.s32 256, 256
      %33 = vsyncadd [#allocation8], %s32
      %s34 = sshll.u32 [#allocation7], 4
      %s35 = int_to_ptr.vmem [resolvable:$true] %s34
      %40 = dma.hbm_to_vmem [thread:$0]  %s2, 256, %s35, [#allocation8], 128, 128, 8
    $region5: #{tpu_custom_call.1} parent=1 // pred_fallthru
      _
    // Predicated region
    $region6: #{tpu_custom_call.1} parent=1 // pred_check
      _
    $region7: #{tpu_custom_call.1} parent=1 // pred_check_branch
      %42 = sbr.rel (0) target = $region9
    $region8: #{tpu_custom_call.1} parent=1 // pred_region
      %s44 = ssub.s32 256, 256
      %45 = vsyncadd [#allocation11], %s44
      %s46 = sshll.u32 [#allocation10], 4
      %s47 = int_to_ptr.vmem [resolvable:$true] %s46
      %52 = dma.hbm_to_vmem [thread:$0]  %s3, 256, %s47, [#allocation11], 128, 128, 8
    $region9: #{tpu_custom_call.1} parent=1 // pred_fallthru
      _
    // Predicated region
    $region10: #{tpu_custom_call.1} parent=1 // pred_check
      _
    $region11: #{tpu_custom_call.1} parent=1 // pred_check_branch
      %54 = sbr.rel (0) target = $region13
    $region12: #{tpu_custom_call.1} parent=1 // pred_region
      %s56 = ssub.s32 2048, 2048
      %57 = vsyncadd [#allocation11], %s56
      %s58 = sshll.u32 [#allocation12], 4
      %s59 = int_to_ptr.vmem [resolvable:$true] %s58
      %64 = dma.hbm_to_vmem [thread:$0]  %s6, 2048, %s59, [#allocation11], 128, 128, 8
    $region13: #{tpu_custom_call.1} parent=1 // pred_fallthru
      _
    // Predicated region
    $region14: #{tpu_custom_call.1} parent=1 // pred_check
      _
    $region15: #{tpu_custom_call.1} parent=1 // pred_check_branch
      %66 = sbr.rel (0) target = $region17
    $region16: #{tpu_custom_call.1} parent=1 // pred_region
      _
    $region17: #{tpu_custom_call.1} parent=1 // pred_fallthru
      _
    // Predicated region
    $region18: #{tpu_custom_call.1} parent=1 // pred_check
      _
    $region19: #{tpu_custom_call.1} parent=1 // pred_check_branch
      %68 = sbr.rel (0) target = $region21
    $region20: #{tpu_custom_call.1} parent=1 // pred_region
      %s70 = ssub.s32 8192, 8192
      %71 = vsyncadd [#allocation14], %s70
      %s72 = sshll.u32 [#allocation13], 4
      %s73 = int_to_ptr.vmem [resolvable:$true] %s72
      %78 = dma.hbm_to_vmem [thread:$0]  %s8, 8192, %s73, [#allocation14], 128, 128, 8
    $region21: #{tpu_custom_call.1} parent=1 // pred_fallthru
      _
    // Predicated region
    $region22: #{tpu_custom_call.1} parent=1 // pred_check
      _
    $region23: #{tpu_custom_call.1} parent=1 // pred_check_branch
      %80 = sbr.rel (0) target = $region25
    $region24: #{tpu_custom_call.1} parent=1 // pred_region
      _
    $region25: #{tpu_custom_call.1} parent=1 // pred_fallthru
      _
    // Predicated region
    $region26: #{tpu_custom_call.1} parent=1 // pred_check
      _
    $region27: #{tpu_custom_call.1} parent=1 // pred_check_branch
      %82 = sbr.rel (0) target = $region29
    $region28: #{tpu_custom_call.1} parent=1 // pred_region
      %s84 = ssub.s32 8192, 8192
      %85 = vsyncadd [#allocation14], %s84
      %s86 = sshll.u32 [#allocation15], 4
      %s87 = int_to_ptr.vmem [resolvable:$true] %s86
      %92 = dma.hbm_to_vmem [thread:$0]  %s10, 8192, %s87, [#allocation14], 128, 128, 8
    $region29: #{tpu_custom_call.1} parent=1 // pred_fallthru
      _
    // Predicated region
    $region30: #{tpu_custom_call.1} parent=1 // pred_check
      _
    $region31: #{tpu_custom_call.1} parent=1 // pred_check_branch
      %94 = sbr.rel (0) target = $region33
    $region32: #{tpu_custom_call.1} parent=1 // pred_region
      _
    $region33: #{tpu_custom_call.1} parent=1 // pred_fallthru
      _
    // Predicated region
    $region34: #{tpu_custom_call.1} parent=1 // pred_check
      _
    $region35: #{tpu_custom_call.1} parent=1 // pred_check_branch
      %96 = sbr.rel (0) target = $region37
    $region36: #{tpu_custom_call.1} parent=1 // pred_region
      %97 = dma.done [#allocation8], 256
    $region37: #{tpu_custom_call.1} parent=1 // pred_fallthru
      _
    // Predicated region
    $region38: #{tpu_custom_call.1} parent=1 // pred_check
      _
    $region39: #{tpu_custom_call.1} parent=1 // pred_check_branch
      %99 = sbr.rel (0) target = $region41
    $region40: #{tpu_custom_call.1} parent=1 // pred_region
      %100 = dma.done [#allocation11], 256
    $region41: #{tpu_custom_call.1} parent=1 // pred_fallthru
      _
    // Predicated region
    $region42: #{tpu_custom_call.1} parent=1 // pred_check
      _
    $region43: #{tpu_custom_call.1} parent=1 // pred_check_branch
      %102 = sbr.rel (0) target = $region45
    $region44: #{tpu_custom_call.1} parent=1 // pred_region
      %103 = dma.done [#allocation11], 2048
    $region45: #{tpu_custom_call.1} parent=1 // pred_fallthru
      _
    // Predicated region
    $region46: #{tpu_custom_call.1} parent=1 // pred_check
      _
    $region47: #{tpu_custom_call.1} parent=1 // pred_check_branch
      %105 = sbr.rel (0) target = $region49
    $region48: #{tpu_custom_call.1} parent=1 // pred_region
      %106 = dma.done [#allocation14], 8192
    $region49: #{tpu_custom_call.1} parent=1 // pred_fallthru
      _
    // Predicated region
    $region50: #{tpu_custom_call.1} parent=1 // pred_check
      _
    $region51: #{tpu_custom_call.1} parent=1 // pred_check_branch
      %108 = sbr.rel (0) target = $region53
    $region52: #{tpu_custom_call.1} parent=1 // pred_region
      %109 = dma.done [#allocation14], 8192
    $region53: #{tpu_custom_call.1} parent=1 // pred_fallthru
      _
    %s111 = sld [smem:[#allocation5]]
    %s112 = smul.addr %s111, 16
    %s113 = scalar_lea.hbm %s4, %s112
    // Predicated region
    $region54: #{tpu_custom_call.1} parent=1 // pred_check
      _
    $region55: #{tpu_custom_call.1} parent=1 // pred_check_branch
      %115 = sbr.rel target = $region57
    $region56: #{tpu_custom_call.1} parent=1 // pred_region
      %116 = sst [smem:[#allocation19]] [#allocation18]
      %117 = sst [smem:[#allocation20]] [#allocation17]
    $region57: #{tpu_custom_call.1} parent=1 // pred_fallthru
      _
    %119 = shalt.err (0)
    %s121 = sshll.u32 [#allocation2], 4
    %s122 = int_to_ptr.vmem [resolvable:$true] %s121
    %124 = dma.hbm_to_vmem [thread:$0]  %s113, 16, %s122, [#allocation3]
    %s125 = sld [smem:[#allocation5 + $0x1]]
    %s126 = smul.addr %s125, 16
    %s127 = scalar_lea.hbm %s4, %s126
    %s128 = scalar_lea.vmem [#allocation2], 1
    %s129 = scalar_lea.sflag [#allocation3], 1
    // Predicated region
    $region58: #{tpu_custom_call.1} parent=1 // pred_check
      _
    $region59: #{tpu_custom_call.1} parent=1 // pred_check_branch
      %131 = sbr.rel target = $region61
    $region60: #{tpu_custom_call.1} parent=1 // pred_region
      %132 = sst [smem:[#allocation19]] [#allocation22]
      %133 = sst [smem:[#allocation20]] [#allocation21]
    $region61: #{tpu_custom_call.1} parent=1 // pred_fallthru
      _
    %135 = shalt.err (0)
    %s137 = sshll.u32 %s128, 4
    %s138 = int_to_ptr.vmem [resolvable:$true] %s137
    %140 = dma.hbm_to_vmem [thread:$0]  %s127, 16, %s138, %s129
    %s141 = sld [smem:[#allocation5 + $0x2]]
    %s142 = smul.addr %s141, 16
    %s143 = scalar_lea.hbm %s4, %s142
    %s144 = scalar_lea.vmem [#allocation2], 2
    %s145 = scalar_lea.sflag [#allocation3], 2
    // Predicated region
    $region62: #{tpu_custom_call.1} parent=1 // pred_check
      _
    $region63: #{tpu_custom_call.1} parent=1 // pred_check_branch
      %147 = sbr.rel target = $region65
    $region64: #{tpu_custom_call.1} parent=1 // pred_region
      %148 = sst [smem:[#allocation19]] [#allocation24]
      %149 = sst [smem:[#allocation20]] [#allocation23]
    $region65: #{tpu_custom_call.1} parent=1 // pred_fallthru
      _
    %151 = shalt.err (0)
    %s153 = sshll.u32 %s144, 4
    %s154 = int_to_ptr.vmem [resolvable:$true] %s153
    %156 = dma.hbm_to_vmem [thread:$0]  %s143, 16, %s154, %s145
    %s157 = sld [smem:[#allocation5 + $0x3]]
    %s158 = smul.addr %s157, 16
    %s159 = scalar_lea.hbm %s4, %s158
    %s160 = scalar_lea.vmem [#allocation2], 3
    %s161 = scalar_lea.sflag [#allocation3], 3
    // Predicated region
    $region66: #{tpu_custom_call.1} parent=1 // pred_check
      _
    $region67: #{tpu_custom_call.1} parent=1 // pred_check_branch
      %163 = sbr.rel target = $region69
    $region68: #{tpu_custom_call.1} parent=1 // pred_region
      %164 = sst [smem:[#allocation19]] [#allocation26]
      %165 = sst [smem:[#allocation20]] [#allocation25]
    $region69: #{tpu_custom_call.1} parent=1 // pred_fallthru
      _
    %167 = shalt.err (0)
    %s169 = sshll.u32 %s160, 4
    %s170 = int_to_ptr.vmem [resolvable:$true] %s169
    %172 = dma.hbm_to_vmem [thread:$0]  %s159, 16, %s170, %s161
    %s173 = sld [smem:[#allocation5 + $0x80]]
    %s174 = smul.addr %s173, 16
    %s175 = scalar_lea.hbm %s4, %s174
    %s176 = scalar_lea.vmem [#allocation2], 4
    %s177 = scalar_lea.sflag [#allocation3], 4
    // Predicated region
    $region70: #{tpu_custom_call.1} parent=1 // pred_check
      _
    $region71: #{tpu_custom_call.1} parent=1 // pred_check_branch
      %179 = sbr.rel target = $region73
    $region72: #{tpu_custom_call.1} parent=1 // pred_region
      %180 = sst [smem:[#allocation19]] [#allocation28]
      %181 = sst [smem:[#allocation20]] [#allocation27]
    $region73: #{tpu_custom_call.1} parent=1 // pred_fallthru
      _
    %183 = shalt.err (0)
    %s185 = sshll.u32 %s176, 4
    %s186 = int_to_ptr.vmem [resolvable:$true] %s185
    %188 = dma.hbm_to_vmem [thread:$0]  %s175, 16, %s186, %s177
    %s189 = sld [smem:[#allocation5 + $0x81]]
    %s190 = smul.addr %s189, 16
    %s191 = scalar_lea.hbm %s4, %s190
    %s192 = scalar_lea.vmem [#allocation2], 5
    %s193 = scalar_lea.sflag [#allocation3], 5
    // Predicated region
    $region74: #{tpu_custom_call.1} parent=1 // pred_check
      _
    $region75: #{tpu_custom_call.1} parent=1 // pred_check_branch
      %195 = sbr.rel target = $region77
    $region76: #{tpu_custom_call.1} parent=1 // pred_region
      %196 = sst [smem:[#allocation19]] [#allocation30]
      %197 = sst [smem:[#allocation20]] [#allocation29]
    $region77: #{tpu_custom_call.1} parent=1 // pred_fallthru
      _
    %199 = shalt.err (0)
    %s201 = sshll.u32 %s192, 4
    %s202 = int_to_ptr.vmem [resolvable:$true] %s201
    %204 = dma.hbm_to_vmem [thread:$0]  %s191, 16, %s202, %s193
    %s205 = sld [smem:[#allocation5 + $0x82]]
    %s206 = smul.addr %s205, 16
    %s207 = scalar_lea.hbm %s4, %s206
    %s208 = scalar_lea.vmem [#allocation2], 6
    %s209 = scalar_lea.sflag [#allocation3], 6
    // Predicated region
    $region78: #{tpu_custom_call.1} parent=1 // pred_check
      _
    $region79: #{tpu_custom_call.1} parent=1 // pred_check_branch
      %211 = sbr.rel target = $region81
    $region80: #{tpu_custom_call.1} parent=1 // pred_region
      %212 = sst [smem:[#allocation19]] [#allocation32]
      %213 = sst [smem:[#allocation20]] [#allocation31]
    $region81: #{tpu_custom_call.1} parent=1 // pred_fallthru
      _
    %215 = shalt.err (0)
    %s217 = sshll.u32 %s208, 4
    %s218 = int_to_ptr.vmem [resolvable:$true] %s217
    %220 = dma.hbm_to_vmem [thread:$0]  %s207, 16, %s218, %s209
    %s221 = sld [smem:[#allocation5 + $0x83]]
    %s222 = smul.addr %s221, 16
    %s223 = scalar_lea.hbm %s4, %s222
    %s224 = scalar_lea.vmem [#allocation2], 7
    %s225 = scalar_lea.sflag [#allocation3], 7
    // Predicated region
    $region82: #{tpu_custom_call.1} parent=1 // pred_check
      _
    $region83: #{tpu_custom_call.1} parent=1 // pred_check_branch
      %227 = sbr.rel target = $region85
    $region84: #{tpu_custom_call.1} parent=1 // pred_region
      %228 = sst [smem:[#allocation19]] [#allocation34]
      %229 = sst [smem:[#allocation20]] [#allocation33]
    $region85: #{tpu_custom_call.1} parent=1 // pred_fallthru
      _
    %231 = shalt.err (0)
    %s233 = sshll.u32 %s224, 4
    %s234 = int_to_ptr.vmem [resolvable:$true] %s233
    %236 = dma.hbm_to_vmem [thread:$0]  %s223, 16, %s234, %s225
    %s237 = sld [smem:[#allocation6]]
    %s238 = smul.addr %s237, 16
    %s239 = scalar_lea.hbm %s5, %s238
    %s240 = scalar_lea.vmem [#allocation2], 8
    %s241 = scalar_lea.sflag [#allocation3], 8
    // Predicated region
    $region86: #{tpu_custom_call.1} parent=1 // pred_check
      _
    $region87: #{tpu_custom_call.1} parent=1 // pred_check_branch
      %243 = sbr.rel target = $region89
    $region88: #{tpu_custom_call.1} parent=1 // pred_region
      %244 = sst [smem:[#allocation19]] [#allocation36]
      %245 = sst [smem:[#allocation20]] [#allocation35]
    $region89: #{tpu_custom_call.1} parent=1 // pred_fallthru
      _
    %247 = shalt.err (0)
    %s249 = sshll.u32 %s240, 4
    %s250 = int_to_ptr.vmem [resolvable:$true] %s249
    %252 = dma.hbm_to_vmem [thread:$0]  %s239, 16, %s250, %s241
    %s253 = sld [smem:[#allocation6 + $0x1]]
    %s254 = smul.addr %s253, 16
    %s255 = scalar_lea.hbm %s5, %s254
    %s256 = scalar_lea.vmem [#allocation2], 9
    %s257 = scalar_lea.sflag [#allocation3], 9
    // Predicated region
    $region90: #{tpu_custom_call.1} parent=1 // pred_check
      _
    $region91: #{tpu_custom_call.1} parent=1 // pred_check_branch
      %259 = sbr.rel target = $region93
    $region92: #{tpu_custom_call.1} parent=1 // pred_region
      %260 = sst [smem:[#allocation19]] [#allocation38]
      %261 = sst [smem:[#allocation20]] [#allocation37]
    $region93: #{tpu_custom_call.1} parent=1 // pred_fallthru
      _
    %263 = shalt.err (0)
    %s265 = sshll.u32 %s256, 4
    %s266 = int_to_ptr.vmem [resolvable:$true] %s265
    %268 = dma.hbm_to_vmem [thread:$0]  %s255, 16, %s266, %s257
    %v269 = vld [vmem:[#allocation7] sm:$0xff]
    %v270 = vld [vmem:[#allocation7 + $0x8] sm:$0xff]
    %v271 = vunpack.c.l.bf16 %v269
    %v272 = vunpack.c.h.bf16 %v269
    %v273 = vunpack.c.l.bf16 %v270
    %v274 = vunpack.c.h.bf16 %v270
    %v275 = vrot.slane %v271, 4
    %v276 = vadd.f32 %v271, %v275
    %v277 = vrot.slane %v276, 2
    %v278 = vadd.f32 %v276, %v277
    %v279 = vrot.slane %v278, 1
    %v280 = vadd.f32 %v278, %v279
    %v281 = vrot.slane %v272, 4
    %v282 = vadd.f32 %v272, %v281
    %v283 = vrot.slane %v282, 2
    %v284 = vadd.f32 %v282, %v283
    %v285 = vrot.slane %v284, 1
    %v286 = vadd.f32 %v284, %v285
    %v287 = vrot.slane %v273, 4
    %v288 = vadd.f32 %v273, %v287
    %v289 = vrot.slane %v288, 2
    %v290 = vadd.f32 %v288, %v289
    %v291 = vrot.slane %v290, 1
    %v292 = vadd.f32 %v290, %v291
    %v293 = vrot.slane %v274, 4
    %v294 = vadd.f32 %v274, %v293
    %v295 = vrot.slane %v294, 2
    %v296 = vadd.f32 %v294, %v295
    %v297 = vrot.slane %v296, 1
    %v298 = vadd.f32 %v296, %v297
    %v299 = vrcp.pop 8.0
    %v300 = vmul.f32 %v280, %v299
    %v301 = vmul.f32 %v286, %v299
    %v302 = vmul.f32 %v292, %v299
    %v303 = vmul.f32 %v298, %v299
    %v304 = vld [vmem:[#allocation10] sm:$0xff]
    %v305 = vld [vmem:[#allocation10 + $0x8] sm:$0xff]
    %v306 = vunpack.c.l.bf16 %v304
    %v307 = vunpack.c.h.bf16 %v304
    %v308 = vunpack.c.l.bf16 %v305
    %v309 = vunpack.c.h.bf16 %v305
    %v310 = vrot.slane %v306, 4
    %v311 = vadd.f32 %v306, %v310
    %v312 = vrot.slane %v311, 2
    %v313 = vadd.f32 %v311, %v312
    %v314 = vrot.slane %v313, 1
    %v315 = vadd.f32 %v313, %v314
    %v316 = vrot.slane %v307, 4
    %v317 = vadd.f32 %v307, %v316
    %v318 = vrot.slane %v317, 2
    %v319 = vadd.f32 %v317, %v318
    %v320 = vrot.slane %v319, 1
    %v321 = vadd.f32 %v319, %v320
    %v322 = vrot.slane %v308, 4
    %v323 = vadd.f32 %v308, %v322
    %v324 = vrot.slane %v323, 2
    %v325 = vadd.f32 %v323, %v324
    %v326 = vrot.slane %v325, 1
    %v327 = vadd.f32 %v325, %v326
    %v328 = vrot.slane %v309, 4
    %v329 = vadd.f32 %v309, %v328
    %v330 = vrot.slane %v329, 2
    %v331 = vadd.f32 %v329, %v330
    %v332 = vrot.slane %v331, 1
    %v333 = vadd.f32 %v331, %v332
    %v334 = vmul.f32 %v315, %v299
    %v335 = vmul.f32 %v321, %v299
    %v336 = vmul.f32 %v327, %v299
    %v337 = vmul.f32 %v333, %v299
    %s338 = smul.u32 1, 1
    %s339 = sshll.u32 %s338, 4
    %340 = dma.done [#allocation3], %s339
    %s341 = sshll.u32 %s338, 4
    %342 = dma.done %s129, %s341
    %s343 = sshll.u32 %s338, 4
    %344 = dma.done %s145, %s343
    %s345 = sshll.u32 %s338, 4
    %346 = dma.done %s161, %s345
    %s347 = sshll.u32 %s338, 4
    %348 = dma.done %s177, %s347
    %s349 = sshll.u32 %s338, 4
    %350 = dma.done %s193, %s349
    %s351 = sshll.u32 %s338, 4
    %352 = dma.done %s209, %s351
    %s353 = sshll.u32 %s338, 4
    %354 = dma.done %s225, %s353
    %s355 = sshll.u32 %s338, 4
    %356 = dma.done %s241, %s355
    %s357 = sshll.u32 %s338, 4
    %358 = dma.done %s257, %s357
    %v359 = vld [vmem:[#allocation2] sm:$0xff]
    %v360 = vld [vmem:[#allocation2 + $0x8] sm:$0x3]
    %vm361 = vcmask 1043456
    %v362 = vsel %vm361, %v359, 0.0
    %v363 = vrot.slane %v362, 4
    %v364 = vadd.f32 %v362, %v363
    %v365 = vrot.slane %v364, 2
    %v366 = vadd.f32 %v364, %v365
    %v367 = vrot.slane %v366, 1
    %v368 = vadd.f32 %v366, %v367
    %v369 = vrcp.pop 4.0
    %v370 = vmul.f32 %v368, %v369
    %v372 = vrot.slane %v359, 4
    %v374 = vsel %vm361, %v372, 0.0
    %v375 = vrot.slane %v374, 4
    %v376 = vadd.f32 %v374, %v375
    %v377 = vrot.slane %v376, 2
    %v378 = vadd.f32 %v376, %v377
    %v379 = vrot.slane %v378, 1
    %v380 = vadd.f32 %v378, %v379
    %v381 = vmul.f32 %v380, %v369
    %vm382 = vcmask 1040384
    %v383 = vsel %vm382, %v370, %v381
    %v385 = vrot.slane %v360, 6
    %vm387 = vcmask 1041408
    %v388 = vsel %vm387, %v383, %v385
    %v389 = vpack.c.bf16 %v388, %v388
    %v390 = vld [vmem:[#allocation12] sm:$0xff]
    %v391 = vld [vmem:[#allocation12 + $0x8] sm:$0xff]
    %v392 = vld [vmem:[#allocation12 + $0x10] sm:$0xff]
    %v393 = vld [vmem:[#allocation12 + $0x18] sm:$0xff]
    %v394 = vld [vmem:[#allocation12 + $0x20] sm:$0xff]
    %v395 = vld [vmem:[#allocation12 + $0x28] sm:$0xff]
    %v396 = vld [vmem:[#allocation12 + $0x30] sm:$0xff]
    %v397 = vld [vmem:[#allocation12 + $0x38] sm:$0xff]
    %v398 = vld [vmem:[#allocation12 + $0x40] sm:$0xff]
    %v399 = vld [vmem:[#allocation12 + $0x48] sm:$0xff]
    %v400 = vld [vmem:[#allocation12 + $0x50] sm:$0xff]
    %v401 = vld [vmem:[#allocation12 + $0x58] sm:$0xff]
    %v402 = vld [vmem:[#allocation12 + $0x60] sm:$0xff]
    %v403 = vld [vmem:[#allocation12 + $0x68] sm:$0xff]
    %v404 = vld [vmem:[#allocation12 + $0x70] sm:$0xff]
    %v405 = vld [vmem:[#allocation12 + $0x78] sm:$0xff]
    %v406 = vld [vmem:[%s7] sm:$0x3]
    %v408 = vlaneseq
    %v409 = vshrl.u32 %v408, 7
    %v410 = vsub.s32 0, %v409
    %v411 = vrot.slane %v406, %v410
    %v412 = vlaneseq
    %v413 = vshrl.u32 %v412, 7
    %v414 = vsub.s32 1, %v413
    %v415 = vrot.slane %v406, %v414
    %v434 = vunpack.c.l.b16 %v390
    %v435 = vunpack.c.h.b16 %v390
    %v436 = vunpack.c.l.b16 %v391
    %v437 = vunpack.c.h.b16 %v391
    %v438 = vunpack.c.l.b16 %v392
    %v439 = vunpack.c.h.b16 %v392
    %v440 = vunpack.c.l.b16 %v393
    %v441 = vunpack.c.h.b16 %v393
    %v442 = vunpack.c.l.b16 %v394
    %v443 = vunpack.c.h.b16 %v394
    %v444 = vunpack.c.l.b16 %v395
    %v445 = vunpack.c.h.b16 %v395
    %v446 = vunpack.c.l.b16 %v396
    %v447 = vunpack.c.h.b16 %v396
    %v448 = vunpack.c.l.b16 %v397
    %v449 = vunpack.c.h.b16 %v397
    %v450 = vunpack.c.l.b16 %v398
    %v451 = vunpack.c.h.b16 %v398
    %v452 = vunpack.c.l.b16 %v399
    %v453 = vunpack.c.h.b16 %v399
    %v454 = vunpack.c.l.b16 %v400
    %v455 = vunpack.c.h.b16 %v400
    %v456 = vunpack.c.l.b16 %v401
    %v457 = vunpack.c.h.b16 %v401
    %v458 = vunpack.c.l.b16 %v402
    %v459 = vunpack.c.h.b16 %v402
    %v460 = vunpack.c.l.b16 %v403
    %v461 = vunpack.c.h.b16 %v403
    %v462 = vunpack.c.l.b16 %v404
    %v463 = vunpack.c.h.b16 %v404
    %v464 = vunpack.c.l.b16 %v405
    %v465 = vunpack.c.h.b16 %v405
    %v466 = vpack.c.b16 %v436, %v434
    %v467 = vpack.c.b16 %v437, %v435
    %v468 = vpack.c.b16 %v440, %v438
    %v469 = vpack.c.b16 %v441, %v439
    %v470 = vpack.c.b16 %v444, %v442
    %v471 = vpack.c.b16 %v445, %v443
    %v472 = vpack.c.b16 %v448, %v446
    %v473 = vpack.c.b16 %v449, %v447
    %v474 = vpack.c.b16 %v452, %v450
    %v475 = vpack.c.b16 %v453, %v451
    %v476 = vpack.c.b16 %v456, %v454
    %v477 = vpack.c.b16 %v457, %v455
    %v478 = vpack.c.b16 %v460, %v458
    %v479 = vpack.c.b16 %v461, %v459
    %v480 = vpack.c.b16 %v464, %v462
    %v481 = vpack.c.b16 %v465, %v463
    %498 = vmatprep.subr.bf16.mxu0 %v467
    %499 = vmatpush1.bf16.msra.mxu0 %v466
    %500 = vmatprep.subr.bf16.mxu0 %v469
    %501 = vmatpush1.bf16.msra.mxu0 %v468
    %502 = vmatprep.subr.bf16.mxu0 %v471
    %503 = vmatpush1.bf16.msra.mxu0 %v470
    %504 = vmatprep.subr.bf16.mxu0 %v473
    %505 = vmatpush1.bf16.msra.mxu0 %v472
    %506 = vmatprep.subr.bf16.mxu0 %v475
    %507 = vmatpush1.bf16.msra.mxu0 %v474
    %508 = vmatprep.subr.bf16.mxu0 %v477
    %509 = vmatpush1.bf16.msra.mxu0 %v476
    %510 = vmatprep.subr.bf16.mxu0 %v479
    %511 = vmatpush1.bf16.msra.mxu0 %v478
    %512 = vmatprep.subr.bf16.mxu0 %v481
    %513 = vmatpush1.bf16.msra.mxu0 %v480
    %514 = vmatprep.subr.bf16.mxu0 0
    %515 = vmatpush1.bf16.msra.mxu0 0
    %516 = vmatprep.subr.bf16.mxu0 0
    %517 = vmatpush1.bf16.msra.mxu0 0
    %518 = vmatprep.subr.bf16.mxu0 0
    %519 = vmatpush1.bf16.msra.mxu0 0
    %520 = vmatprep.subr.bf16.mxu0 0
    %521 = vmatpush1.bf16.msra.mxu0 0
    %522 = vmatprep.subr.bf16.mxu0 0
    %523 = vmatpush1.bf16.msra.mxu0 0
    %524 = vmatprep.subr.bf16.mxu0 0
    %525 = vmatpush1.bf16.msra.mxu0 0
    %526 = vmatprep.subr.bf16.mxu0 0
    %527 = vmatpush1.bf16.msra.mxu0 0
    %528 = vmatprep.subr.bf16.mxu0 0
    %529 = vmatpush1.bf16.msra.mxu0 0
    %530 = vmatprep.mubr.bf16.mxu0 0
    %531 = vmatmul.mubr.bf16.gmra.mrb[0].mxu0 %v389
    %v532 = vpop.f32.mrb[0].mxu0
    %v533 = vadd.f32 %v411, %v532
    %v534 = vpop.f32.mrb[0].mxu0
    %v535 = vadd.f32 %v415, %v534
    %v536 = vpop.f32.mrb[0].mxu0
    %v537 = vpop.f32.mrb[0].mxu0
    %538 = vdwg.mxu0
    %v539 = vmul.f32 %v300, 0.5
    %v540 = vmul.f32 %v301, 0.5
    %v541 = vmul.f32 %v302, 0.5
    %v542 = vmul.f32 %v303, 0.5
    %v543 = vmul.f32 %v533, 1.5
    %v544 = vmul.f32 %v535, 1.5
    %vm549 = vcmask 1041409
    %v550 = vsel %vm549, %v541, %v539
    %v551 = vsel %vm549, %v542, %v540
    %v554 = vmul.f32 %v334, 0.5
    %v555 = vmul.f32 %v335, 0.5
    %v556 = vmul.f32 %v336, 0.5
    %v557 = vmul.f32 %v337, 0.5
    %v562 = vsel %vm549, %v556, %v554
    %v563 = vsel %vm549, %v557, %v555
    %v568 = vrot.slane %v543, 2
    %v569 = vrot.slane %v544, 2
    %v572 = vpack.c.bf16 %v550, %v550
    %v573 = vpack.c.bf16 %v551, %v551
    %v574 = vpack.c.bf16 %v543, %v543
    %v575 = vpack.c.bf16 %v544, %v544
    %v576 = vld [vmem:[#allocation13] sm:$0xff]
    %v577 = vld [vmem:[#allocation13 + $0x8] sm:$0xff]
    %v578 = vld [vmem:[#allocation13 + $0x10] sm:$0xff]
    %v579 = vld [vmem:[#allocation13 + $0x18] sm:$0xff]
    %v580 = vld [vmem:[#allocation13 + $0x20] sm:$0xff]
    %v581 = vld [vmem:[#allocation13 + $0x28] sm:$0xff]
    %v582 = vld [vmem:[#allocation13 + $0x30] sm:$0xff]
    %v583 = vld [vmem:[#allocation13 + $0x38] sm:$0xff]
    %v584 = vld [vmem:[#allocation13 + $0x40] sm:$0xff]
    %v585 = vld [vmem:[#allocation13 + $0x48] sm:$0xff]
    %v586 = vld [vmem:[#allocation13 + $0x50] sm:$0xff]
    %v587 = vld [vmem:[#allocation13 + $0x58] sm:$0xff]
    %v588 = vld [vmem:[#allocation13 + $0x60] sm:$0xff]
    %v589 = vld [vmem:[#allocation13 + $0x68] sm:$0xff]
    %v590 = vld [vmem:[#allocation13 + $0x70] sm:$0xff]
    %v591 = vld [vmem:[#allocation13 + $0x78] sm:$0xff]
    %v592 = vld [vmem:[#allocation13 + $0x80] sm:$0xff]
    %v593 = vld [vmem:[#allocation13 + $0x88] sm:$0xff]
    %v594 = vld [vmem:[#allocation13 + $0x90] sm:$0xff]
    %v595 = vld [vmem:[#allocation13 + $0x98] sm:$0xff]
    %v596 = vld [vmem:[#allocation13 + $0xa0] sm:$0xff]
    %v597 = vld [vmem:[#allocation13 + $0xa8] sm:$0xff]
    %v598 = vld [vmem:[#allocation13 + $0xb0] sm:$0xff]
    %v599 = vld [vmem:[#allocation13 + $0xb8] sm:$0xff]
    %v600 = vld [vmem:[#allocation13 + $0xc0] sm:$0xff]
    %v601 = vld [vmem:[#allocation13 + $0xc8] sm:$0xff]
    %v602 = vld [vmem:[#allocation13 + $0xd0] sm:$0xff]
    %v603 = vld [vmem:[#allocation13 + $0xd8] sm:$0xff]
    %v604 = vld [vmem:[#allocation13 + $0xe0] sm:$0xff]
    %v605 = vld [vmem:[#allocation13 + $0xe8] sm:$0xff]
    %v606 = vld [vmem:[#allocation13 + $0xf0] sm:$0xff]
    %v607 = vld [vmem:[#allocation13 + $0xf8] sm:$0xff]
    %v608 = vld [vmem:[#allocation13 + $0x100] sm:$0xff]
    %v609 = vld [vmem:[#allocation13 + $0x108] sm:$0xff]
    %v610 = vld [vmem:[#allocation13 + $0x110] sm:$0xff]
    %v611 = vld [vmem:[#allocation13 + $0x118] sm:$0xff]
    %v612 = vld [vmem:[#allocation13 + $0x120] sm:$0xff]
    %v613 = vld [vmem:[#allocation13 + $0x128] sm:$0xff]
    %v614 = vld [vmem:[#allocation13 + $0x130] sm:$0xff]
    %v615 = vld [vmem:[#allocation13 + $0x138] sm:$0xff]
    %v616 = vld [vmem:[#allocation13 + $0x140] sm:$0xff]
    %v617 = vld [vmem:[#allocation13 + $0x148] sm:$0xff]
    %v618 = vld [vmem:[#allocation13 + $0x150] sm:$0xff]
    %v619 = vld [vmem:[#allocation13 + $0x158] sm:$0xff]
    %v620 = vld [vmem:[#allocation13 + $0x160] sm:$0xff]
    %v621 = vld [vmem:[#allocation13 + $0x168] sm:$0xff]
    %v622 = vld [vmem:[#allocation13 + $0x170] sm:$0xff]
    %v623 = vld [vmem:[#allocation13 + $0x178] sm:$0xff]
    %v624 = vld [vmem:[#allocation13 + $0x180] sm:$0xff]
    %v625 = vld [vmem:[#allocation13 + $0x188] sm:$0xff]
    %v626 = vld [vmem:[#allocation13 + $0x190] sm:$0xff]
    %v627 = vld [vmem:[#allocation13 + $0x198] sm:$0xff]
    %v628 = vld [vmem:[#allocation13 + $0x1a0] sm:$0xff]
    %v629 = vld [vmem:[#allocation13 + $0x1a8] sm:$0xff]
    %v630 = vld [vmem:[#allocation13 + $0x1b0] sm:$0xff]
    %v631 = vld [vmem:[#allocation13 + $0x1b8] sm:$0xff]
    %v632 = vld [vmem:[#allocation13 + $0x1c0] sm:$0xff]
    %v633 = vld [vmem:[#allocation13 + $0x1c8] sm:$0xff]
    %v634 = vld [vmem:[#allocation13 + $0x1d0] sm:$0xff]
    %v635 = vld [vmem:[#allocation13 + $0x1d8] sm:$0xff]
    %v636 = vld [vmem:[#allocation13 + $0x1e0] sm:$0xff]
    %v637 = vld [vmem:[#allocation13 + $0x1e8] sm:$0xff]
    %v638 = vld [vmem:[#allocation13 + $0x1f0] sm:$0xff]
    %v639 = vld [vmem:[#allocation13 + $0x1f8] sm:$0xff]
    %v640 = vld [vmem:[%s9] sm:$0x3]
    %v642 = vlaneseq
    %v643 = vshrl.u32 %v642, 7
    %v644 = vsub.s32 0, %v643
    %v645 = vrot.slane %v640, %v644
    %v646 = vlaneseq
    %v647 = vshrl.u32 %v646, 7
    %v648 = vsub.s32 1, %v647
    %v649 = vrot.slane %v640, %v648
    %v716 = vunpack.c.l.b16 %v576
    %v717 = vunpack.c.h.b16 %v576
    %v718 = vunpack.c.l.b16 %v577
    %v719 = vunpack.c.h.b16 %v577
    %v720 = vunpack.c.l.b16 %v578
    %v721 = vunpack.c.h.b16 %v578
    %v722 = vunpack.c.l.b16 %v579
    %v723 = vunpack.c.h.b16 %v579
    %v724 = vunpack.c.l.b16 %v580
    %v725 = vunpack.c.h.b16 %v580
    %v726 = vunpack.c.l.b16 %v581
    %v727 = vunpack.c.h.b16 %v581
    %v728 = vunpack.c.l.b16 %v582
    %v729 = vunpack.c.h.b16 %v582
    %v730 = vunpack.c.l.b16 %v583
    %v731 = vunpack.c.h.b16 %v583
    %v732 = vunpack.c.l.b16 %v584
    %v733 = vunpack.c.h.b16 %v584
    %v734 = vunpack.c.l.b16 %v585
    %v735 = vunpack.c.h.b16 %v585
    %v736 = vunpack.c.l.b16 %v586
    %v737 = vunpack.c.h.b16 %v586
    %v738 = vunpack.c.l.b16 %v587
    %v739 = vunpack.c.h.b16 %v587
    %v740 = vunpack.c.l.b16 %v588
    %v741 = vunpack.c.h.b16 %v588
    %v742 = vunpack.c.l.b16 %v589
    %v743 = vunpack.c.h.b16 %v589
    %v744 = vunpack.c.l.b16 %v590
    %v745 = vunpack.c.h.b16 %v590
    %v746 = vunpack.c.l.b16 %v591
    %v747 = vunpack.c.h.b16 %v591
    %v748 = vunpack.c.l.b16 %v592
    %v749 = vunpack.c.h.b16 %v592
    %v750 = vunpack.c.l.b16 %v593
    %v751 = vunpack.c.h.b16 %v593
    %v752 = vunpack.c.l.b16 %v594
    %v753 = vunpack.c.h.b16 %v594
    %v754 = vunpack.c.l.b16 %v595
    %v755 = vunpack.c.h.b16 %v595
    %v756 = vunpack.c.l.b16 %v596
    %v757 = vunpack.c.h.b16 %v596
    %v758 = vunpack.c.l.b16 %v597
    %v759 = vunpack.c.h.b16 %v597
    %v760 = vunpack.c.l.b16 %v598
    %v761 = vunpack.c.h.b16 %v598
    %v762 = vunpack.c.l.b16 %v599
    %v763 = vunpack.c.h.b16 %v599
    %v764 = vunpack.c.l.b16 %v600
    %v765 = vunpack.c.h.b16 %v600
    %v766 = vunpack.c.l.b16 %v601
    %v767 = vunpack.c.h.b16 %v601
    %v768 = vunpack.c.l.b16 %v602
    %v769 = vunpack.c.h.b16 %v602
    %v770 = vunpack.c.l.b16 %v603
    %v771 = vunpack.c.h.b16 %v603
    %v772 = vunpack.c.l.b16 %v604
    %v773 = vunpack.c.h.b16 %v604
    %v774 = vunpack.c.l.b16 %v605
    %v775 = vunpack.c.h.b16 %v605
    %v776 = vunpack.c.l.b16 %v606
    %v777 = vunpack.c.h.b16 %v606
    %v778 = vunpack.c.l.b16 %v607
    %v779 = vunpack.c.h.b16 %v607
    %v780 = vunpack.c.l.b16 %v608
    %v781 = vunpack.c.h.b16 %v608
    %v782 = vunpack.c.l.b16 %v609
    %v783 = vunpack.c.h.b16 %v609
    %v784 = vunpack.c.l.b16 %v610
    %v785 = vunpack.c.h.b16 %v610
    %v786 = vunpack.c.l.b16 %v611
    %v787 = vunpack.c.h.b16 %v611
    %v788 = vunpack.c.l.b16 %v612
    %v789 = vunpack.c.h.b16 %v612
    %v790 = vunpack.c.l.b16 %v613
    %v791 = vunpack.c.h.b16 %v613
    %v792 = vunpack.c.l.b16 %v614
    %v793 = vunpack.c.h.b16 %v614
    %v794 = vunpack.c.l.b16 %v615
    %v795 = vunpack.c.h.b16 %v615
    %v796 = vunpack.c.l.b16 %v616
    %v797 = vunpack.c.h.b16 %v616
    %v798 = vunpack.c.l.b16 %v617
    %v799 = vunpack.c.h.b16 %v617
    %v800 = vunpack.c.l.b16 %v618
    %v801 = vunpack.c.h.b16 %v618
    %v802 = vunpack.c.l.b16 %v619
    %v803 = vunpack.c.h.b16 %v619
    %v804 = vunpack.c.l.b16 %v620
    %v805 = vunpack.c.h.b16 %v620
    %v806 = vunpack.c.l.b16 %v621
    %v807 = vunpack.c.h.b16 %v621
    %v808 = vunpack.c.l.b16 %v622
    %v809 = vunpack.c.h.b16 %v622
    %v810 = vunpack.c.l.b16 %v623
    %v811 = vunpack.c.h.b16 %v623
    %v812 = vunpack.c.l.b16 %v624
    %v813 = vunpack.c.h.b16 %v624
    %v814 = vunpack.c.l.b16 %v625
    %v815 = vunpack.c.h.b16 %v625
    %v816 = vunpack.c.l.b16 %v626
    %v817 = vunpack.c.h.b16 %v626
    %v818 = vunpack.c.l.b16 %v627
    %v819 = vunpack.c.h.b16 %v627
    %v820 = vunpack.c.l.b16 %v628
    %v821 = vunpack.c.h.b16 %v628
    %v822 = vunpack.c.l.b16 %v629
    %v823 = vunpack.c.h.b16 %v629
    %v824 = vunpack.c.l.b16 %v630
    %v825 = vunpack.c.h.b16 %v630
    %v826 = vunpack.c.l.b16 %v631
    %v827 = vunpack.c.h.b16 %v631
    %v828 = vunpack.c.l.b16 %v632
    %v829 = vunpack.c.h.b16 %v632
    %v830 = vunpack.c.l.b16 %v633
    %v831 = vunpack.c.h.b16 %v633
    %v832 = vunpack.c.l.b16 %v634
    %v833 = vunpack.c.h.b16 %v634
    %v834 = vunpack.c.l.b16 %v635
    %v835 = vunpack.c.h.b16 %v635
    %v836 = vunpack.c.l.b16 %v636
    %v837 = vunpack.c.h.b16 %v636
    %v838 = vunpack.c.l.b16 %v637
    %v839 = vunpack.c.h.b16 %v637
    %v840 = vunpack.c.l.b16 %v638
    %v841 = vunpack.c.h.b16 %v638
    %v842 = vunpack.c.l.b16 %v639
    %v843 = vunpack.c.h.b16 %v639
    %v844 = vpack.c.b16 %v718, %v716
    %v845 = vpack.c.b16 %v719, %v717
    %v846 = vpack.c.b16 %v722, %v720
    %v847 = vpack.c.b16 %v723, %v721
    %v848 = vpack.c.b16 %v726, %v724
    %v849 = vpack.c.b16 %v727, %v725
    %v850 = vpack.c.b16 %v730, %v728
    %v851 = vpack.c.b16 %v731, %v729
    %v852 = vpack.c.b16 %v734, %v732
    %v853 = vpack.c.b16 %v735, %v733
    %v854 = vpack.c.b16 %v738, %v736
    %v855 = vpack.c.b16 %v739, %v737
    %v856 = vpack.c.b16 %v742, %v740
    %v857 = vpack.c.b16 %v743, %v741
    %v858 = vpack.c.b16 %v746, %v744
    %v859 = vpack.c.b16 %v747, %v745
    %v860 = vpack.c.b16 %v750, %v748
    %v861 = vpack.c.b16 %v751, %v749
    %v862 = vpack.c.b16 %v754, %v752
    %v863 = vpack.c.b16 %v755, %v753
    %v864 = vpack.c.b16 %v758, %v756
    %v865 = vpack.c.b16 %v759, %v757
    %v866 = vpack.c.b16 %v762, %v760
    %v867 = vpack.c.b16 %v763, %v761
    %v868 = vpack.c.b16 %v766, %v764
    %v869 = vpack.c.b16 %v767, %v765
    %v870 = vpack.c.b16 %v770, %v768
    %v871 = vpack.c.b16 %v771, %v769
    %v872 = vpack.c.b16 %v774, %v772
    %v873 = vpack.c.b16 %v775, %v773
    %v874 = vpack.c.b16 %v778, %v776
    %v875 = vpack.c.b16 %v779, %v777
    %v876 = vpack.c.b16 %v782, %v780
    %v877 = vpack.c.b16 %v783, %v781
    %v878 = vpack.c.b16 %v786, %v784
    %v879 = vpack.c.b16 %v787, %v785
    %v880 = vpack.c.b16 %v790, %v788
    %v881 = vpack.c.b16 %v791, %v789
    %v882 = vpack.c.b16 %v794, %v792
    %v883 = vpack.c.b16 %v795, %v793
    %v884 = vpack.c.b16 %v798, %v796
    %v885 = vpack.c.b16 %v799, %v797
    %v886 = vpack.c.b16 %v802, %v800
    %v887 = vpack.c.b16 %v803, %v801
    %v888 = vpack.c.b16 %v806, %v804
    %v889 = vpack.c.b16 %v807, %v805
    %v890 = vpack.c.b16 %v810, %v808
    %v891 = vpack.c.b16 %v811, %v809
    %v892 = vpack.c.b16 %v814, %v812
    %v893 = vpack.c.b16 %v815, %v813
    %v894 = vpack.c.b16 %v818, %v816
    %v895 = vpack.c.b16 %v819, %v817
    %v896 = vpack.c.b16 %v822, %v820
    %v897 = vpack.c.b16 %v823, %v821
    %v898 = vpack.c.b16 %v826, %v824
    %v899 = vpack.c.b16 %v827, %v825
    %v900 = vpack.c.b16 %v830, %v828
    %v901 = vpack.c.b16 %v831, %v829
    %v902 = vpack.c.b16 %v834, %v832
    %v903 = vpack.c.b16 %v835, %v833
    %v904 = vpack.c.b16 %v838, %v836
    %v905 = vpack.c.b16 %v839, %v837
    %v906 = vpack.c.b16 %v842, %v840
    %v907 = vpack.c.b16 %v843, %v841
    %972 = vmatprep.subr.bf16.mxu0 %v845
    %973 = vmatpush1.bf16.msra.mxu0 %v844
    %974 = vmatprep.subr.bf16.mxu0 %v847
    %975 = vmatpush1.bf16.msra.mxu0 %v846
    %976 = vmatprep.subr.bf16.mxu0 %v849
    %977 = vmatpush1.bf16.msra.mxu0 %v848
    %978 = vmatprep.subr.bf16.mxu0 %v851
    %979 = vmatpush1.bf16.msra.mxu0 %v850
    %980 = vmatprep.subr.bf16.mxu0 %v853
    %981 = vmatpush1.bf16.msra.mxu0 %v852
    %982 = vmatprep.subr.bf16.mxu0 %v855
    %983 = vmatpush1.bf16.msra.mxu0 %v854
    %984 = vmatprep.subr.bf16.mxu0 %v857
    %985 = vmatpush1.bf16.msra.mxu0 %v856
    %986 = vmatprep.subr.bf16.mxu0 %v859
    %987 = vmatpush1.bf16.msra.mxu0 %v858
    %988 = vmatprep.subr.bf16.mxu0 %v861
    %989 = vmatpush1.bf16.msra.mxu0 %v860
    %990 = vmatprep.subr.bf16.mxu0 %v863
    %991 = vmatpush1.bf16.msra.mxu0 %v862
    %992 = vmatprep.subr.bf16.mxu0 %v865
    %993 = vmatpush1.bf16.msra.mxu0 %v864
    %994 = vmatprep.subr.bf16.mxu0 %v867
    %995 = vmatpush1.bf16.msra.mxu0 %v866
    %996 = vmatprep.subr.bf16.mxu0 %v869
    %997 = vmatpush1.bf16.msra.mxu0 %v868
    %998 = vmatprep.subr.bf16.mxu0 %v871
    %999 = vmatpush1.bf16.msra.mxu0 %v870
    %1000 = vmatprep.subr.bf16.mxu0 %v873
    %1001 = vmatpush1.bf16.msra.mxu0 %v872
    %1002 = vmatprep.subr.bf16.mxu0 %v875
    %1003 = vmatpush1.bf16.msra.mxu0 %v874
    %1004 = vmatprep.mubr.bf16.mxu0 %v573
    %1005 = vmatmul.mubr.bf16.gmra.mrb[0].mxu0 %v572
    %v1006 = vpop.f32.mrb[0].mxu0
    %v1007 = vadd.f32 %v645, %v1006
    %v1008 = vpop.f32.mrb[0].mxu0
    %v1009 = vadd.f32 %v649, %v1008
    %v1010 = vpop.f32.mrb[0].mxu0
    %v1011 = vpop.f32.mrb[0].mxu0
    %1012 = vdwg.mxu0
    %1013 = vmatprep.subr.bf16.mxu0 %v877
    %1014 = vmatpush1.bf16.msra.mxu0 %v876
    %1015 = vmatprep.subr.bf16.mxu0 %v879
    %1016 = vmatpush1.bf16.msra.mxu0 %v878
    %1017 = vmatprep.subr.bf16.mxu0 %v881
    %1018 = vmatpush1.bf16.msra.mxu0 %v880
    %1019 = vmatprep.subr.bf16.mxu0 %v883
    %1020 = vmatpush1.bf16.msra.mxu0 %v882
    %1021 = vmatprep.subr.bf16.mxu0 %v885
    %1022 = vmatpush1.bf16.msra.mxu0 %v884
    %1023 = vmatprep.subr.bf16.mxu0 %v887
    %1024 = vmatpush1.bf16.msra.mxu0 %v886
    %1025 = vmatprep.subr.bf16.mxu0 %v889
    %1026 = vmatpush1.bf16.msra.mxu0 %v888
    %1027 = vmatprep.subr.bf16.mxu0 %v891
    %1028 = vmatpush1.bf16.msra.mxu0 %v890
    %1029 = vmatprep.subr.bf16.mxu0 %v893
    %1030 = vmatpush1.bf16.msra.mxu0 %v892
    %1031 = vmatprep.subr.bf16.mxu0 %v895
    %1032 = vmatpush1.bf16.msra.mxu0 %v894
    %1033 = vmatprep.subr.bf16.mxu0 %v897
    %1034 = vmatpush1.bf16.msra.mxu0 %v896
    %1035 = vmatprep.subr.bf16.mxu0 %v899
    %1036 = vmatpush1.bf16.msra.mxu0 %v898
    %1037 = vmatprep.subr.bf16.mxu0 %v901
    %1038 = vmatpush1.bf16.msra.mxu0 %v900
    %1039 = vmatprep.subr.bf16.mxu0 %v903
    %1040 = vmatpush1.bf16.msra.mxu0 %v902
    %1041 = vmatprep.subr.bf16.mxu0 %v905
    %1042 = vmatpush1.bf16.msra.mxu0 %v904
    %1043 = vmatprep.subr.bf16.mxu0 %v907
    %1044 = vmatpush1.bf16.msra.mxu0 %v906
    %1045 = vmatprep.mubr.bf16.mxu0 %v575
    %1046 = vmatmul.mubr.bf16.gmra.mrb[0].mxu0 %v574
    %v1047 = vpop.f32.mrb[0].mxu0
    %v1048 = vadd.f32 %v1007, %v1047
    %v1049 = vpop.f32.mrb[0].mxu0
    %v1050 = vadd.f32 %v1009, %v1049
    %v1051 = vpop.f32.mrb[0].mxu0
    %v1052 = vpop.f32.mrb[0].mxu0
    %1053 = vdwg.mxu0
    %v1054 = vpack.c.bf16 %v562, %v562
    %v1055 = vpack.c.bf16 %v563, %v563
    %v1056 = vpack.c.bf16 %v568, %v568
    %v1057 = vpack.c.bf16 %v569, %v569
    %v1058 = vld [vmem:[#allocation15] sm:$0xff]
    %v1059 = vld [vmem:[#allocation15 + $0x8] sm:$0xff]
    %v1060 = vld [vmem:[#allocation15 + $0x10] sm:$0xff]
    %v1061 = vld [vmem:[#allocation15 + $0x18] sm:$0xff]
    %v1062 = vld [vmem:[#allocation15 + $0x20] sm:$0xff]
    %v1063 = vld [vmem:[#allocation15 + $0x28] sm:$0xff]
    %v1064 = vld [vmem:[#allocation15 + $0x30] sm:$0xff]
    %v1065 = vld [vmem:[#allocation15 + $0x38] sm:$0xff]
    %v1066 = vld [vmem:[#allocation15 + $0x40] sm:$0xff]
    %v1067 = vld [vmem:[#allocation15 + $0x48] sm:$0xff]
    %v1068 = vld [vmem:[#allocation15 + $0x50] sm:$0xff]
    %v1069 = vld [vmem:[#allocation15 + $0x58] sm:$0xff]
    %v1070 = vld [vmem:[#allocation15 + $0x60] sm:$0xff]
    %v1071 = vld [vmem:[#allocation15 + $0x68] sm:$0xff]
    %v1072 = vld [vmem:[#allocation15 + $0x70] sm:$0xff]
    %v1073 = vld [vmem:[#allocation15 + $0x78] sm:$0xff]
    %v1074 = vld [vmem:[#allocation15 + $0x80] sm:$0xff]
    %v1075 = vld [vmem:[#allocation15 + $0x88] sm:$0xff]
    %v1076 = vld [vmem:[#allocation15 + $0x90] sm:$0xff]
    %v1077 = vld [vmem:[#allocation15 + $0x98] sm:$0xff]
    %v1078 = vld [vmem:[#allocation15 + $0xa0] sm:$0xff]
    %v1079 = vld [vmem:[#allocation15 + $0xa8] sm:$0xff]
    %v1080 = vld [vmem:[#allocation15 + $0xb0] sm:$0xff]
    %v1081 = vld [vmem:[#allocation15 + $0xb8] sm:$0xff]
    %v1082 = vld [vmem:[#allocation15 + $0xc0] sm:$0xff]
    %v1083 = vld [vmem:[#allocation15 + $0xc8] sm:$0xff]
    %v1084 = vld [vmem:[#allocation15 + $0xd0] sm:$0xff]
    %v1085 = vld [vmem:[#allocation15 + $0xd8] sm:$0xff]
    %v1086 = vld [vmem:[#allocation15 + $0xe0] sm:$0xff]
    %v1087 = vld [vmem:[#allocation15 + $0xe8] sm:$0xff]
    %v1088 = vld [vmem:[#allocation15 + $0xf0] sm:$0xff]
    %v1089 = vld [vmem:[#allocation15 + $0xf8] sm:$0xff]
    %v1090 = vld [vmem:[#allocation15 + $0x100] sm:$0xff]
    %v1091 = vld [vmem:[#allocation15 + $0x108] sm:$0xff]
    %v1092 = vld [vmem:[#allocation15 + $0x110] sm:$0xff]
    %v1093 = vld [vmem:[#allocation15 + $0x118] sm:$0xff]
    %v1094 = vld [vmem:[#allocation15 + $0x120] sm:$0xff]
    %v1095 = vld [vmem:[#allocation15 + $0x128] sm:$0xff]
    %v1096 = vld [vmem:[#allocation15 + $0x130] sm:$0xff]
    %v1097 = vld [vmem:[#allocation15 + $0x138] sm:$0xff]
    %v1098 = vld [vmem:[#allocation15 + $0x140] sm:$0xff]
    %v1099 = vld [vmem:[#allocation15 + $0x148] sm:$0xff]
    %v1100 = vld [vmem:[#allocation15 + $0x150] sm:$0xff]
    %v1101 = vld [vmem:[#allocation15 + $0x158] sm:$0xff]
    %v1102 = vld [vmem:[#allocation15 + $0x160] sm:$0xff]
    %v1103 = vld [vmem:[#allocation15 + $0x168] sm:$0xff]
    %v1104 = vld [vmem:[#allocation15 + $0x170] sm:$0xff]
    %v1105 = vld [vmem:[#allocation15 + $0x178] sm:$0xff]
    %v1106 = vld [vmem:[#allocation15 + $0x180] sm:$0xff]
    %v1107 = vld [vmem:[#allocation15 + $0x188] sm:$0xff]
    %v1108 = vld [vmem:[#allocation15 + $0x190] sm:$0xff]
    %v1109 = vld [vmem:[#allocation15 + $0x198] sm:$0xff]
    %v1110 = vld [vmem:[#allocation15 + $0x1a0] sm:$0xff]
    %v1111 = vld [vmem:[#allocation15 + $0x1a8] sm:$0xff]
    %v1112 = vld [vmem:[#allocation15 + $0x1b0] sm:$0xff]
    %v1113 = vld [vmem:[#allocation15 + $0x1b8] sm:$0xff]
    %v1114 = vld [vmem:[#allocation15 + $0x1c0] sm:$0xff]
    %v1115 = vld [vmem:[#allocation15 + $0x1c8] sm:$0xff]
    %v1116 = vld [vmem:[#allocation15 + $0x1d0] sm:$0xff]
    %v1117 = vld [vmem:[#allocation15 + $0x1d8] sm:$0xff]
    %v1118 = vld [vmem:[#allocation15 + $0x1e0] sm:$0xff]
    %v1119 = vld [vmem:[#allocation15 + $0x1e8] sm:$0xff]
    %v1120 = vld [vmem:[#allocation15 + $0x1f0] sm:$0xff]
    %v1121 = vld [vmem:[#allocation15 + $0x1f8] sm:$0xff]
    %v1122 = vld [vmem:[%s11] sm:$0x3]
    %v1124 = vlaneseq
    %v1125 = vshrl.u32 %v1124, 7
    %v1126 = vsub.s32 0, %v1125
    %v1127 = vrot.slane %v1122, %v1126
    %v1128 = vlaneseq
    %v1129 = vshrl.u32 %v1128, 7
    %v1130 = vsub.s32 1, %v1129
    %v1131 = vrot.slane %v1122, %v1130
    %v1198 = vunpack.c.l.b16 %v1058
    %v1199 = vunpack.c.h.b16 %v1058
    %v1200 = vunpack.c.l.b16 %v1059
    %v1201 = vunpack.c.h.b16 %v1059
    %v1202 = vunpack.c.l.b16 %v1060
    %v1203 = vunpack.c.h.b16 %v1060
    %v1204 = vunpack.c.l.b16 %v1061
    %v1205 = vunpack.c.h.b16 %v1061
    %v1206 = vunpack.c.l.b16 %v1062
    %v1207 = vunpack.c.h.b16 %v1062
    %v1208 = vunpack.c.l.b16 %v1063
    %v1209 = vunpack.c.h.b16 %v1063
    %v1210 = vunpack.c.l.b16 %v1064
    %v1211 = vunpack.c.h.b16 %v1064
    %v1212 = vunpack.c.l.b16 %v1065
    %v1213 = vunpack.c.h.b16 %v1065
    %v1214 = vunpack.c.l.b16 %v1066
    %v1215 = vunpack.c.h.b16 %v1066
    %v1216 = vunpack.c.l.b16 %v1067
    %v1217 = vunpack.c.h.b16 %v1067
    %v1218 = vunpack.c.l.b16 %v1068
    %v1219 = vunpack.c.h.b16 %v1068
    %v1220 = vunpack.c.l.b16 %v1069
    %v1221 = vunpack.c.h.b16 %v1069
    %v1222 = vunpack.c.l.b16 %v1070
    %v1223 = vunpack.c.h.b16 %v1070
    %v1224 = vunpack.c.l.b16 %v1071
    %v1225 = vunpack.c.h.b16 %v1071
    %v1226 = vunpack.c.l.b16 %v1072
    %v1227 = vunpack.c.h.b16 %v1072
    %v1228 = vunpack.c.l.b16 %v1073
    %v1229 = vunpack.c.h.b16 %v1073
    %v1230 = vunpack.c.l.b16 %v1074
    %v1231 = vunpack.c.h.b16 %v1074
    %v1232 = vunpack.c.l.b16 %v1075
    %v1233 = vunpack.c.h.b16 %v1075
    %v1234 = vunpack.c.l.b16 %v1076
    %v1235 = vunpack.c.h.b16 %v1076
    %v1236 = vunpack.c.l.b16 %v1077
    %v1237 = vunpack.c.h.b16 %v1077
    %v1238 = vunpack.c.l.b16 %v1078
    %v1239 = vunpack.c.h.b16 %v1078
    %v1240 = vunpack.c.l.b16 %v1079
    %v1241 = vunpack.c.h.b16 %v1079
    %v1242 = vunpack.c.l.b16 %v1080
    %v1243 = vunpack.c.h.b16 %v1080
    %v1244 = vunpack.c.l.b16 %v1081
    %v1245 = vunpack.c.h.b16 %v1081
    %v1246 = vunpack.c.l.b16 %v1082
    %v1247 = vunpack.c.h.b16 %v1082
    %v1248 = vunpack.c.l.b16 %v1083
    %v1249 = vunpack.c.h.b16 %v1083
    %v1250 = vunpack.c.l.b16 %v1084
    %v1251 = vunpack.c.h.b16 %v1084
    %v1252 = vunpack.c.l.b16 %v1085
    %v1253 = vunpack.c.h.b16 %v1085
    %v1254 = vunpack.c.l.b16 %v1086
    %v1255 = vunpack.c.h.b16 %v1086
    %v1256 = vunpack.c.l.b16 %v1087
    %v1257 = vunpack.c.h.b16 %v1087
    %v1258 = vunpack.c.l.b16 %v1088
    %v1259 = vunpack.c.h.b16 %v1088
    %v1260 = vunpack.c.l.b16 %v1089
    %v1261 = vunpack.c.h.b16 %v1089
    %v1262 = vunpack.c.l.b16 %v1090
    %v1263 = vunpack.c.h.b16 %v1090
    %v1264 = vunpack.c.l.b16 %v1091
    %v1265 = vunpack.c.h.b16 %v1091
    %v1266 = vunpack.c.l.b16 %v1092
    %v1267 = vunpack.c.h.b16 %v1092
    %v1268 = vunpack.c.l.b16 %v1093
    %v1269 = vunpack.c.h.b16 %v1093
    %v1270 = vunpack.c.l.b16 %v1094
    %v1271 = vunpack.c.h.b16 %v1094
    %v1272 = vunpack.c.l.b16 %v1095
    %v1273 = vunpack.c.h.b16 %v1095
    %v1274 = vunpack.c.l.b16 %v1096
    %v1275 = vunpack.c.h.b16 %v1096
    %v1276 = vunpack.c.l.b16 %v1097
    %v1277 = vunpack.c.h.b16 %v1097
    %v1278 = vunpack.c.l.b16 %v1098
    %v1279 = vunpack.c.h.b16 %v1098
    %v1280 = vunpack.c.l.b16 %v1099
    %v1281 = vunpack.c.h.b16 %v1099
    %v1282 = vunpack.c.l.b16 %v1100
    %v1283 = vunpack.c.h.b16 %v1100
    %v1284 = vunpack.c.l.b16 %v1101
    %v1285 = vunpack.c.h.b16 %v1101
    %v1286 = vunpack.c.l.b16 %v1102
    %v1287 = vunpack.c.h.b16 %v1102
    %v1288 = vunpack.c.l.b16 %v1103
    %v1289 = vunpack.c.h.b16 %v1103
    %v1290 = vunpack.c.l.b16 %v1104
    %v1291 = vunpack.c.h.b16 %v1104
    %v1292 = vunpack.c.l.b16 %v1105
    %v1293 = vunpack.c.h.b16 %v1105
    %v1294 = vunpack.c.l.b16 %v1106
    %v1295 = vunpack.c.h.b16 %v1106
    %v1296 = vunpack.c.l.b16 %v1107
    %v1297 = vunpack.c.h.b16 %v1107
    %v1298 = vunpack.c.l.b16 %v1108
    %v1299 = vunpack.c.h.b16 %v1108
    %v1300 = vunpack.c.l.b16 %v1109
    %v1301 = vunpack.c.h.b16 %v1109
    %v1302 = vunpack.c.l.b16 %v1110
    %v1303 = vunpack.c.h.b16 %v1110
    %v1304 = vunpack.c.l.b16 %v1111
    %v1305 = vunpack.c.h.b16 %v1111
    %v1306 = vunpack.c.l.b16 %v1112
    %v1307 = vunpack.c.h.b16 %v1112
    %v1308 = vunpack.c.l.b16 %v1113
    %v1309 = vunpack.c.h.b16 %v1113
    %v1310 = vunpack.c.l.b16 %v1114
    %v1311 = vunpack.c.h.b16 %v1114
    %v1312 = vunpack.c.l.b16 %v1115
    %v1313 = vunpack.c.h.b16 %v1115
    %v1314 = vunpack.c.l.b16 %v1116
    %v1315 = vunpack.c.h.b16 %v1116
    %v1316 = vunpack.c.l.b16 %v1117
    %v1317 = vunpack.c.h.b16 %v1117
    %v1318 = vunpack.c.l.b16 %v1118
    %v1319 = vunpack.c.h.b16 %v1118
    %v1320 = vunpack.c.l.b16 %v1119
    %v1321 = vunpack.c.h.b16 %v1119
    %v1322 = vunpack.c.l.b16 %v1120
    %v1323 = vunpack.c.h.b16 %v1120
    %v1324 = vunpack.c.l.b16 %v1121
    %v1325 = vunpack.c.h.b16 %v1121
    %v1326 = vpack.c.b16 %v1200, %v1198
    %v1327 = vpack.c.b16 %v1201, %v1199
    %v1328 = vpack.c.b16 %v1204, %v1202
    %v1329 = vpack.c.b16 %v1205, %v1203
    %v1330 = vpack.c.b16 %v1208, %v1206
    %v1331 = vpack.c.b16 %v1209, %v1207
    %v1332 = vpack.c.b16 %v1212, %v1210
    %v1333 = vpack.c.b16 %v1213, %v1211
    %v1334 = vpack.c.b16 %v1216, %v1214
    %v1335 = vpack.c.b16 %v1217, %v1215
    %v1336 = vpack.c.b16 %v1220, %v1218
    %v1337 = vpack.c.b16 %v1221, %v1219
    %v1338 = vpack.c.b16 %v1224, %v1222
    %v1339 = vpack.c.b16 %v1225, %v1223
    %v1340 = vpack.c.b16 %v1228, %v1226
    %v1341 = vpack.c.b16 %v1229, %v1227
    %v1342 = vpack.c.b16 %v1232, %v1230
    %v1343 = vpack.c.b16 %v1233, %v1231
    %v1344 = vpack.c.b16 %v1236, %v1234
    %v1345 = vpack.c.b16 %v1237, %v1235
    %v1346 = vpack.c.b16 %v1240, %v1238
    %v1347 = vpack.c.b16 %v1241, %v1239
    %v1348 = vpack.c.b16 %v1244, %v1242
    %v1349 = vpack.c.b16 %v1245, %v1243
    %v1350 = vpack.c.b16 %v1248, %v1246
    %v1351 = vpack.c.b16 %v1249, %v1247
    %v1352 = vpack.c.b16 %v1252, %v1250
    %v1353 = vpack.c.b16 %v1253, %v1251
    %v1354 = vpack.c.b16 %v1256, %v1254
    %v1355 = vpack.c.b16 %v1257, %v1255
    %v1356 = vpack.c.b16 %v1260, %v1258
    %v1357 = vpack.c.b16 %v1261, %v1259
    %v1358 = vpack.c.b16 %v1264, %v1262
    %v1359 = vpack.c.b16 %v1265, %v1263
    %v1360 = vpack.c.b16 %v1268, %v1266
    %v1361 = vpack.c.b16 %v1269, %v1267
    %v1362 = vpack.c.b16 %v1272, %v1270
    %v1363 = vpack.c.b16 %v1273, %v1271
    %v1364 = vpack.c.b16 %v1276, %v1274
    %v1365 = vpack.c.b16 %v1277, %v1275
    %v1366 = vpack.c.b16 %v1280, %v1278
    %v1367 = vpack.c.b16 %v1281, %v1279
    %v1368 = vpack.c.b16 %v1284, %v1282
    %v1369 = vpack.c.b16 %v1285, %v1283
    %v1370 = vpack.c.b16 %v1288, %v1286
    %v1371 = vpack.c.b16 %v1289, %v1287
    %v1372 = vpack.c.b16 %v1292, %v1290
    %v1373 = vpack.c.b16 %v1293, %v1291
    %v1374 = vpack.c.b16 %v1296, %v1294
    %v1375 = vpack.c.b16 %v1297, %v1295
    %v1376 = vpack.c.b16 %v1300, %v1298
    %v1377 = vpack.c.b16 %v1301, %v1299
    %v1378 = vpack.c.b16 %v1304, %v1302
    %v1379 = vpack.c.b16 %v1305, %v1303
    %v1380 = vpack.c.b16 %v1308, %v1306
    %v1381 = vpack.c.b16 %v1309, %v1307
    %v1382 = vpack.c.b16 %v1312, %v1310
    %v1383 = vpack.c.b16 %v1313, %v1311
    %v1384 = vpack.c.b16 %v1316, %v1314
    %v1385 = vpack.c.b16 %v1317, %v1315
    %v1386 = vpack.c.b16 %v1320, %v1318
    %v1387 = vpack.c.b16 %v1321, %v1319
    %v1388 = vpack.c.b16 %v1324, %v1322
    %v1389 = vpack.c.b16 %v1325, %v1323
    %1454 = vmatprep.subr.bf16.mxu0 %v1327
    %1455 = vmatpush1.bf16.msra.mxu0 %v1326
    %1456 = vmatprep.subr.bf16.mxu0 %v1329
    %1457 = vmatpush1.bf16.msra.mxu0 %v1328
    %1458 = vmatprep.subr.bf16.mxu0 %v1331
    %1459 = vmatpush1.bf16.msra.mxu0 %v1330
    %1460 = vmatprep.subr.bf16.mxu0 %v1333
    %1461 = vmatpush1.bf16.msra.mxu0 %v1332
    %1462 = vmatprep.subr.bf16.mxu0 %v1335
    %1463 = vmatpush1.bf16.msra.mxu0 %v1334
    %1464 = vmatprep.subr.bf16.mxu0 %v1337
    %1465 = vmatpush1.bf16.msra.mxu0 %v1336
    %1466 = vmatprep.subr.bf16.mxu0 %v1339
    %1467 = vmatpush1.bf16.msra.mxu0 %v1338
    %1468 = vmatprep.subr.bf16.mxu0 %v1341
    %1469 = vmatpush1.bf16.msra.mxu0 %v1340
    %1470 = vmatprep.subr.bf16.mxu0 %v1343
    %1471 = vmatpush1.bf16.msra.mxu0 %v1342
    %1472 = vmatprep.subr.bf16.mxu0 %v1345
    %1473 = vmatpush1.bf16.msra.mxu0 %v1344
    %1474 = vmatprep.subr.bf16.mxu0 %v1347
    %1475 = vmatpush1.bf16.msra.mxu0 %v1346
    %1476 = vmatprep.subr.bf16.mxu0 %v1349
    %1477 = vmatpush1.bf16.msra.mxu0 %v1348
    %1478 = vmatprep.subr.bf16.mxu0 %v1351
    %1479 = vmatpush1.bf16.msra.mxu0 %v1350
    %1480 = vmatprep.subr.bf16.mxu0 %v1353
    %1481 = vmatpush1.bf16.msra.mxu0 %v1352
    %1482 = vmatprep.subr.bf16.mxu0 %v1355
    %1483 = vmatpush1.bf16.msra.mxu0 %v1354
    %1484 = vmatprep.subr.bf16.mxu0 %v1357
    %1485 = vmatpush1.bf16.msra.mxu0 %v1356
    %1486 = vmatprep.mubr.bf16.mxu0 %v1055
    %1487 = vmatmul.mubr.bf16.gmra.mrb[0].mxu0 %v1054
    %v1488 = vpop.f32.mrb[0].mxu0
    %v1489 = vadd.f32 %v1127, %v1488
    %v1490 = vpop.f32.mrb[0].mxu0
    %v1491 = vadd.f32 %v1131, %v1490
    %v1492 = vpop.f32.mrb[0].mxu0
    %v1493 = vpop.f32.mrb[0].mxu0
    %1494 = vdwg.mxu0
    %1495 = vmatprep.subr.bf16.mxu0 %v1359
    %1496 = vmatpush1.bf16.msra.mxu0 %v1358
    %1497 = vmatprep.subr.bf16.mxu0 %v1361
    %1498 = vmatpush1.bf16.msra.mxu0 %v1360
    %1499 = vmatprep.subr.bf16.mxu0 %v1363
    %1500 = vmatpush1.bf16.msra.mxu0 %v1362
    %1501 = vmatprep.subr.bf16.mxu0 %v1365
    %1502 = vmatpush1.bf16.msra.mxu0 %v1364
    %1503 = vmatprep.subr.bf16.mxu0 %v1367
    %1504 = vmatpush1.bf16.msra.mxu0 %v1366
    %1505 = vmatprep.subr.bf16.mxu0 %v1369
    %1506 = vmatpush1.bf16.msra.mxu0 %v1368
    %1507 = vmatprep.subr.bf16.mxu0 %v1371
    %1508 = vmatpush1.bf16.msra.mxu0 %v1370
    %1509 = vmatprep.subr.bf16.mxu0 %v1373
    %1510 = vmatpush1.bf16.msra.mxu0 %v1372
    %1511 = vmatprep.subr.bf16.mxu0 %v1375
    %1512 = vmatpush1.bf16.msra.mxu0 %v1374
    %1513 = vmatprep.subr.bf16.mxu0 %v1377
    %1514 = vmatpush1.bf16.msra.mxu0 %v1376
    %1515 = vmatprep.subr.bf16.mxu0 %v1379
    %1516 = vmatpush1.bf16.msra.mxu0 %v1378
    %1517 = vmatprep.subr.bf16.mxu0 %v1381
    %1518 = vmatpush1.bf16.msra.mxu0 %v1380
    %1519 = vmatprep.subr.bf16.mxu0 %v1383
    %1520 = vmatpush1.bf16.msra.mxu0 %v1382
    %1521 = vmatprep.subr.bf16.mxu0 %v1385
    %1522 = vmatpush1.bf16.msra.mxu0 %v1384
    %1523 = vmatprep.subr.bf16.mxu0 %v1387
    %1524 = vmatpush1.bf16.msra.mxu0 %v1386
    %1525 = vmatprep.subr.bf16.mxu0 %v1389
    %1526 = vmatpush1.bf16.msra.mxu0 %v1388
    %1527 = vmatprep.mubr.bf16.mxu0 %v1057
    %1528 = vmatmul.mubr.bf16.gmra.mrb[0].mxu0 %v1056
    %v1529 = vpop.f32.mrb[0].mxu0
    %v1530 = vadd.f32 %v1489, %v1529
    %v1531 = vpop.f32.mrb[0].mxu0
    %v1532 = vadd.f32 %v1491, %v1531
    %v1533 = vpop.f32.mrb[0].mxu0
    %v1534 = vpop.f32.mrb[0].mxu0
    %1535 = vdwg.mxu0
    %v1538 = vrot.slane %v1530, 6
    %v1539 = vrot.slane %v1532, 6
    %v1542 = vsel %vm387, %v1048, %v1538
    %v1543 = vsel %vm387, %v1050, %v1539
    %v1546 = vcombine.low %v1542, %v1543
    %1548 = vst [vmem:[#allocation16] sm:$0xff] %v1546
    // Predicated region
    $region94: #{tpu_custom_call.1} parent=1 // pred_check
      _
    $region95: #{tpu_custom_call.1} parent=1 // pred_check_branch
      %1550 = sbr.rel (0) target = $region97
    $region96: #{tpu_custom_call.1} parent=1 // pred_region
      %s1552 = ssub.s32 128, 128
      %1553 = vsyncadd [#allocation9], %s1552
      %s1555 = sshll.u32 [#allocation16], 4
      %s1556 = int_to_ptr.vmem [resolvable:$true] %s1555
      %1558 = dma.vmem_to_hbm [thread:$0]  %s1556, 128, %s12, [#allocation9]
    $region97: #{tpu_custom_call.1} parent=1 // pred_fallthru
      _
    // Predicated region
    $region98: #{tpu_custom_call.1} parent=1 // pred_check
      _
    $region99: #{tpu_custom_call.1} parent=1 // pred_check_branch
      %1560 = sbr.rel (0) target = $region101
    $region100: #{tpu_custom_call.1} parent=1 // pred_region
      %1561 = dma.done [#allocation9], 128
    $region101: #{tpu_custom_call.1} parent=1 // pred_fallthru
      _
    %1562 = vsyncpa [#allocation8], 1
    %1563 = vsyncpa [#allocation11], 1
    %1564 = vsyncpa [#allocation14], 1
    %1565 = vsyncpa [#allocation9], 1
  %1566 = vsyncmov [#allocation3]
  %s1567 = vpop.sfrf %1566
  %p1568 = scmp.eq.s32.totalorder %s1567, 0
  %p1569 = pneg %p1568
  %1571 = shalt.err (%p1569)
  %s1572 = scalar_lea.sflag [#allocation3], 1
  %1573 = vsyncmov %s1572
  %s1574 = vpop.sfrf %1573
  %p1575 = scmp.eq.s32.totalorder %s1574, 0
  %p1576 = pneg %p1575
  %1578 = shalt.err (%p1576)
  %s1579 = scalar_lea.sflag [#allocation3], 2
  %1580 = vsyncmov %s1579
  %s1581 = vpop.sfrf %1580
  %p1582 = scmp.eq.s32.totalorder %s1581, 0
  %p1583 = pneg %p1582
  %1585 = shalt.err (%p1583)
  %s1586 = scalar_lea.sflag [#allocation3], 3
  %1587 = vsyncmov %s1586
  %s1588 = vpop.sfrf %1587
  %p1589 = scmp.eq.s32.totalorder %s1588, 0
  %p1590 = pneg %p1589
  %1592 = shalt.err (%p1590)
  %s1593 = scalar_lea.sflag [#allocation3], 4
  %1594 = vsyncmov %s1593
  %s1595 = vpop.sfrf %1594
  %p1596 = scmp.eq.s32.totalorder %s1595, 0
  %p1597 = pneg %p1596
  %1599 = shalt.err (%p1597)
  %s1600 = scalar_lea.sflag [#allocation3], 5
  %1601 = vsyncmov %s1600
  %s1602 = vpop.sfrf %1601
  %p1603 = scmp.eq.s32.totalorder %s1602, 0
  %p1604 = pneg %p1603
  %1606 = shalt.err (%p1604)
  %s1607 = scalar_lea.sflag [#allocation3], 6
  %1608 = vsyncmov %s1607
  %s1609 = vpop.sfrf %1608
  %p1610 = scmp.eq.s32.totalorder %s1609, 0
  %p1611 = pneg %p1610
  %1613 = shalt.err (%p1611)
  %s1614 = scalar_lea.sflag [#allocation3], 7
  %1615 = vsyncmov %s1614
  %s1616 = vpop.sfrf %1615
  %p1617 = scmp.eq.s32.totalorder %s1616, 0
  %p1618 = pneg %p1617
  %1620 = shalt.err (%p1618)
  %s1621 = scalar_lea.sflag [#allocation3], 8
  %1622 = vsyncmov %s1621
  %s1623 = vpop.sfrf %1622
  %p1624 = scmp.eq.s32.totalorder %s1623, 0
  %p1625 = pneg %p1624
  %1627 = shalt.err (%p1625)
  %s1628 = scalar_lea.sflag [#allocation3], 9
  %1629 = vsyncmov %s1628
  %s1630 = vpop.sfrf %1629
  %p1631 = scmp.eq.s32.totalorder %s1630, 0
  %p1632 = pneg %p1631
  %1634 = shalt.err (%p1632)

</llo_original>
